<compile_context>
chip_gen: v5e
topology: v5e:2x2
jax: 0.10.0
libtpu: 0.0.40
codegen_flags: <defaults>
</compile_context>

<pallas_src>
import jax
import jax.numpy as jnp
from jax.experimental import pallas as pl
from jax.experimental.pallas import tpu as pltpu

CHANNEL_OUT_1 = 32
CHANNEL_OUT_2 = 64
N_CHANNELS = 3
N_CLASSES = 3
IN_FEATURES = 270000              # 3 * 300 * 300

TK = 8192                         # K tile (multiple of 128)
N_SPLITS = 2                      # K reduction split across megacore TCs
N_K_PER_SPLIT = -(-IN_FEATURES // (N_SPLITS * TK))      # ceil-div -> 17
K_PAD = N_SPLITS * N_K_PER_SPLIT * TK                   # 278528


def _fc1_partial_kernel(x_ref, w1_ref, acc_ref):
    """One core's partial fc1: acc[c] = sum_k x[:, k-tile] @ W1[k-tile, :]."""
    k = pl.program_id(1)

    @pl.when(k == 0)
    def _():
        acc_ref[...] = jnp.zeros_like(acc_ref)

    acc_ref[...] += jnp.dot(x_ref[...], w1_ref[...],
                            preferred_element_type=jnp.float32)


def prepare_params(params):
    """One-time prep: pad W1's K dim to K_PAD (keeps the per-call path clean)."""
    w1, b1, w2, b2, w3, b3 = params
    w1p = jnp.pad(w1.astype(jnp.float32), ((0, K_PAD - w1.shape[0]), (0, 0)))
    return (w1p, b1, w2, b2, w3, b3)


def mlp_forward(x, prepared_params):
    """x: (B, C, H, W) float32 with C*H*W == 270000; params from prepare_params."""
    w1p, b1, w2, b2, w3, b3 = prepared_params
    B = x.shape[0]
    xf = x.reshape(B, -1).astype(jnp.float32)
    assert xf.shape[1] == IN_FEATURES
    assert w1p.shape[0] == K_PAD, "call prepare_params() once before forward"

    # Per-call x padding is ~8.5K zero columns (a few hundred KB), negligible
    # next to the 69 MB W1 stream; the zeros contribute 0 to the matmul.
    xf = jnp.pad(xf, ((0, 0), (0, K_PAD - IN_FEATURES)))

    partials = pl.pallas_call(
        _fc1_partial_kernel,
        out_shape=jax.ShapeDtypeStruct((N_SPLITS, B, CHANNEL_OUT_2), jnp.float32),
        grid_spec=pltpu.PrefetchScalarGridSpec(
            num_scalar_prefetch=0,
            grid=(N_SPLITS, N_K_PER_SPLIT),
            in_specs=[
                # x K-tile for split c, step k
                pl.BlockSpec((B, TK),
                             lambda c, k: (0, c * N_K_PER_SPLIT + k)),
                # W1 K-tile for split c, step k
                pl.BlockSpec((TK, CHANNEL_OUT_2),
                             lambda c, k: (c * N_K_PER_SPLIT + k, 0)),
            ],
            # Per-split partial accumulator: block index constant over k
            # -> stays resident in VMEM across the reduction.
            out_specs=pl.BlockSpec((None, B, CHANNEL_OUT_2),
                                   lambda c, k: (c, 0, 0)),
        ),
        compiler_params=pltpu.CompilerParams(
            dimension_semantics=("parallel", "arbitrary"),
            vmem_limit_bytes=48 * 1024 * 1024,
        ),
    )(xf, w1p)

    # Tiny epilogue: combine the two megacore partials and run fc2/fc3.
    # These are (B,64)@(64,32) and (B,32)@(32,3) -- negligible vs the W1 stream.
    h1 = jnp.maximum(jnp.sum(partials, axis=0) + b1, 0.0)   # relu(fc1)
    h2 = jnp.maximum(h1 @ w2 + b2, 0.0)                     # relu(fc2)
    return h2 @ w3 + b3                                     # fc3


def init_params(key):
    """Deterministic synthetic parameters, shapes matching the PyTorch module.
    Stored as (in, out) so the kernel computes x @ W (== PyTorch x @ W.T)."""
    k1, k2, k3, k4, k5, k6 = jax.random.split(key, 6)
    w1 = jax.random.normal(k1, (IN_FEATURES, CHANNEL_OUT_2), jnp.float32) * 0.01
    b1 = jax.random.normal(k2, (1, CHANNEL_OUT_2), jnp.float32) * 0.01
    w2 = jax.random.normal(k3, (CHANNEL_OUT_2, CHANNEL_OUT_1), jnp.float32) * 0.1
    b2 = jax.random.normal(k4, (1, CHANNEL_OUT_1), jnp.float32) * 0.1
    w3 = jax.random.normal(k5, (CHANNEL_OUT_1, N_CLASSES), jnp.float32) * 0.1
    b3 = jax.random.normal(k6, (1, N_CLASSES), jnp.float32) * 0.1
    return (w1, b1, w2, b2, w3, b3)


if __name__ == "__main__":
    key = jax.random.PRNGKey(0)
    kx, kp = jax.random.split(key)
    # Small batch; spatial dims fixed by the module (270000 = 3 * 300 * 300).
    x = jax.random.normal(kx, (2, N_CHANNELS, 300, 300), jnp.float32)
    params = init_params(kp)
    prepared = prepare_params(params)          # one-time W1 padding (not per call)

    fwd = jax.jit(mlp_forward)
    out = jax.block_until_ready(fwd(x, prepared))

    # Pure-JAX reference for sanity (uses the original, unpadded weights).
    w1, b1, w2, b2, w3, b3 = params
    xf = x.reshape(x.shape[0], -1)
    ref = jnp.maximum(xf @ w1 + b1, 0.0)
    ref = jnp.maximum(ref @ w2 + b2, 0.0)
    ref = ref @ w3 + b3

    assert out.shape == (2, N_CLASSES)
    assert jnp.allclose(out, ref, atol=1e-3, rtol=1e-3)

    print("KERNEL_OK")
</pallas_src>

<mosaic_0001>
module attributes {stable_mosaic.version = 11 : i64} {
  func.func @_fc1_partial_kernel(%arg0: i32, %arg1: i32, %arg2: memref<2x8192xf32, #tpu.memory_space<vmem>>, %arg3: memref<8192x64xf32, #tpu.memory_space<vmem>>, %arg4: memref<1x2x64xf32, #tpu.memory_space<vmem>>) attributes {dimension_semantics = [#tpu.dimension_semantics<parallel>, #tpu.dimension_semantics<arbitrary>], iteration_bounds = array<i64: 2, 17>, scalar_prefetch = 0 : i64, scratch_operands = 0 : i64, tpu.core_type = #tpu.core_type<tc>, window_params = [{transform_indices = @transform_0, window_bounds = array<i64: 2, 8192>}, {transform_indices = @transform_1, window_bounds = array<i64: 8192, 64>}, {transform_indices = @transform_2, window_bounds = array<i64: 1, 2, 64>}]} {
    %c0_i32 = arith.constant 0 : i32
    %0 = arith.cmpi eq, %arg1, %c0_i32 : i32
    %1 = arith.extui %0 : i1 to i32
    %c0_i32_0 = arith.constant 0 : i32
    %2 = arith.cmpi ne, %1, %c0_i32_0 : i32
    scf.if %2 {
      %cst_10 = arith.constant 0.000000e+00 : f32
      %12 = vector.broadcast %cst_10 : f32 to vector<2x64xf32>
      %c0_11 = arith.constant 0 : index
      %c0_12 = arith.constant 0 : index
      %c0_13 = arith.constant 0 : index
      %13 = vector.load %arg4[%c0_11, %c0_12, %c0_13] : memref<1x2x64xf32, #tpu.memory_space<vmem>>, vector<1x2x64xf32>
      %14 = vector.shape_cast %13 : vector<1x2x64xf32> to vector<2x64xf32>
      %15 = vector.shape_cast %12 : vector<2x64xf32> to vector<1x2x64xf32>
      tpu.vector_store %arg4[%c0_11, %c0_12, %c0_13], %15 {strides = array<i32>} : memref<1x2x64xf32, #tpu.memory_space<vmem>>, vector<1x2x64xf32>,
    } else {
    }
    %c0 = arith.constant 0 : index
    %c0_1 = arith.constant 0 : index
    %c0_2 = arith.constant 0 : index
    %3 = vector.load %arg4[%c0, %c0_1, %c0_2] : memref<1x2x64xf32, #tpu.memory_space<vmem>>, vector<1x2x64xf32>
    %4 = vector.shape_cast %3 : vector<1x2x64xf32> to vector<2x64xf32>
    %c0_3 = arith.constant 0 : index
    %c0_4 = arith.constant 0 : index
    %5 = vector.load %arg2[%c0_3, %c0_4] : memref<2x8192xf32, #tpu.memory_space<vmem>>, vector<2x8192xf32>
    %c0_5 = arith.constant 0 : index
    %c0_6 = arith.constant 0 : index
    %6 = vector.load %arg3[%c0_5, %c0_6] : memref<8192x64xf32, #tpu.memory_space<vmem>>, vector<8192x64xf32>
    %cst = arith.constant dense<0.000000e+00> : vector<2x64xf32>
    %7 = tpu.matmul %5, %6, %cst {dimension_numbers = #tpu.dot_dimension_numbers<[1], [0], [0], [1], [0, 0, 1, 1], [], []>} : vector<2x8192xf32>, vector<8192x64xf32>, vector<2x64xf32> -> vector<2x64xf32>
    %8 = arith.addf %4, %7 : vector<2x64xf32>
    %c0_7 = arith.constant 0 : index
    %c0_8 = arith.constant 0 : index
    %c0_9 = arith.constant 0 : index
    %9 = vector.load %arg4[%c0_7, %c0_8, %c0_9] : memref<1x2x64xf32, #tpu.memory_space<vmem>>, vector<1x2x64xf32>
    %10 = vector.shape_cast %9 : vector<1x2x64xf32> to vector<2x64xf32>
    %11 = vector.shape_cast %8 : vector<2x64xf32> to vector<1x2x64xf32>
    tpu.vector_store %arg4[%c0_7, %c0_8, %c0_9], %11 {strides = array<i32>} : memref<1x2x64xf32, #tpu.memory_space<vmem>>, vector<1x2x64xf32>,
    return
  }
  func.func @transform_0(%arg0: i32, %arg1: i32) -> (i32, i32) {
    %c17_i32 = arith.constant 17 : i32
    %0 = arith.muli %arg0, %c17_i32 : i32
    %1 = arith.addi %0, %arg1 : i32
    %c0_i32 = arith.constant 0 : i32
    %c0_i32_0 = arith.constant 0 : i32
    return %c0_i32, %1 : i32, i32
  }
  func.func @transform_1(%arg0: i32, %arg1: i32) -> (i32, i32) {
    %c17_i32 = arith.constant 17 : i32
    %0 = arith.muli %arg0, %c17_i32 : i32
    %1 = arith.addi %0, %arg1 : i32
    %c0_i32 = arith.constant 0 : i32
    %c0_i32_0 = arith.constant 0 : i32
    return %1, %c0_i32 : i32, i32
  }
  func.func @transform_2(%arg0: i32, %arg1: i32) -> (i32, i32, i32) {
    %c0_i32 = arith.constant 0 : i32
    %c0_i32_0 = arith.constant 0 : i32
    %c0_i32_1 = arith.constant 0 : i32
    return %arg0, %c0_i32, %c0_i32_0 : i32, i32, i32
  }
}

</mosaic_0001>

<llo_original>
// kernel: mlp_forward.1
$region0: #{mlp_forward.1}
  #allocation0 [shape = 'u32[]', space=smem, size = 0x4, offset = 0x4, fixed_abs, tag = 'smem constant byte address 0x4 - core index']
  #allocation1 [shape = 'u32[72,128]{1,0:T(1,128)}', space=vmem, size = 0x9000, scoped, tag = 'internal scratch']
  %s0 = inlined_call_operand.vmem [shape: f32[2,278528], index: 0, kind: input, shape index: {}]
  %s1 = inlined_call_operand.hbm [shape: f32[278528,64], index: 1, kind: input, shape index: {}]
  %s2 = inlined_call_operand.vmem [shape: f32[2,2,64], index: 2, kind: output, shape index: {}]
  %s3 = sld [smem:[#allocation0]]
  $region49: #{mlp_forward.1} parent=0
    _
  %s5 = ssub.s32 1, %s3
  %s6 = scalar_select 0, %s5, %s3
  $region1: #{mlp_forward.1} parent=0
    #allocation2 [shape = 'u8[8388608]{0}', space=vmem, size = 0x800000, scoped, tag = 'input window, operand 1']
    #allocation3 [shape = 's32[2]{0}', space=sflag, size = 0x8, scoped, tag = 'scoped memory for mlp_forward.1']
    %7 = vsyncpa [#allocation3], 0
    %s8 = scalar_lea.sflag [#allocation3], 1
    %9 = vsyncpa %s8, 0
    loop: start=0, step=1, limit=36
    $region2: #{mlp_forward.1} parent=1 // loop_pre_header
      _
    $region3: #{mlp_forward.1} parent=1 // loop_header
      %s11 = sphi 0, %s15
      %p12 = scmp.ge.s32.totalorder %s11, 36
      %s18 = sphi 0, %s30
      %s19 = sphi 0, %s26
      %s20 = sphi 0, %s18
      %s21 = sphi 0, %s19
      %s22 = sphi 0, %s20
      %s23 = sphi 0, %s21
      %s37 = sphi 0, %s39
      %s40 = sphi 0, %s37
      %s41 = sphi 0, %s40
      %s57 = sphi 0, %s41
      %s67 = sphi 0, %s69
      %s70 = sphi 0, %s67
      %s71 = sphi 0, %s70
      %s87 = sphi 0, %s71
      %s93 = sphi 0, %s95
      %s96 = sphi 0, %s93
      %s97 = sphi 0, %s96
      %s113 = sphi 0, %s97
    $region4: #{mlp_forward.1} parent=1 // loop_header_branch
      %14 = sbr.rel (%p12) target = $region8
    $region5: #{mlp_forward.1} parent=1 // loop_body
      %s16 = ssub.s32 %s11, 1
      %s17 = ssub.s32 %s11, 2
      %s24 = sadd.s32 1, %s19
      %p25 = scmp.ge.s32.totalorder %s24, 17
      %s26 = scalar_select %p25, 0, %s24
      %s27 = sadd.s32 1, %s18
      %s28 = scalar_select %p25, %s27, %s18
      %p29 = scmp.ge.s32.totalorder %s28, 2
      %s30 = scalar_select %p29, 0, %s28
      %s31 = smul.u32 %s18, 17
      %s32 = sadd.s32 %s31, %s19
      %s33 = smul.u32 %s30, 17
      %s34 = sadd.s32 %s33, %s26
      %s35 = ssub.s32 %s32, %s34
      %p36 = scmp.eq.s32.totalorder %s35, 0
      %s38 = sadd.s32 %s37, 1
      %s39 = scalar_select %p36, %s37, %s38
      %p42 = pneg %p36
      %p43 = scmp.eq.s32.totalorder %s11, 33
      %p44 = por %p42, %p43
      %p45 = scmp.ne.s32.totalorder %s37, %s40
      %p46 = scmp.eq.s32.totalorder %s11, 0
      %p47 = por %p45, %p46
      %p48 = scmp.ne.s32.totalorder %s37, %s40
      %p49 = scmp.eq.s32.totalorder %s16, 33
      %p50 = por %p48, %p49
      %p51 = scmp.ne.s32.totalorder %s40, %s41
      %p52 = scmp.eq.s32.totalorder %s16, 0
      %p53 = por %p51, %p52
      %p54 = scmp.ne.s32.totalorder %s40, %s41
      %p55 = scmp.eq.s32.totalorder %s17, 33
      %p56 = por %p54, %p55
      %p58 = scmp.ne.s32.totalorder %s41, %s57
      %p59 = scmp.eq.s32.totalorder %s17, 0
      %p60 = por %p58, %p59
      %s61 = smul.u32 %s18, 17
      %s62 = sadd.s32 %s61, %s19
      %s63 = smul.u32 %s30, 17
      %s64 = sadd.s32 %s63, %s26
      %s65 = ssub.s32 %s62, %s64
      %p66 = scmp.eq.s32.totalorder %s65, 0
      %s68 = sadd.s32 %s67, 1
      %s69 = scalar_select %p66, %s67, %s68
      %p72 = pneg %p66
      %p73 = scmp.eq.s32.totalorder %s11, 33
      %p74 = por %p72, %p73
      %p75 = scmp.ne.s32.totalorder %s67, %s70
      %p76 = scmp.eq.s32.totalorder %s11, 0
      %p77 = por %p75, %p76
      %p78 = scmp.ne.s32.totalorder %s67, %s70
      %p79 = scmp.eq.s32.totalorder %s16, 33
      %p80 = por %p78, %p79
      %p81 = scmp.ne.s32.totalorder %s70, %s71
      %p82 = scmp.eq.s32.totalorder %s16, 0
      %p83 = por %p81, %p82
      %p84 = scmp.ne.s32.totalorder %s70, %s71
      %p85 = scmp.eq.s32.totalorder %s17, 33
      %p86 = por %p84, %p85
      %p88 = scmp.ne.s32.totalorder %s71, %s87
      %p89 = scmp.eq.s32.totalorder %s17, 0
      %p90 = por %p88, %p89
      %s91 = ssub.s32 %s18, %s30
      %p92 = scmp.eq.s32.totalorder %s91, 0
      %s94 = sadd.s32 %s93, 1
      %s95 = scalar_select %p92, %s93, %s94
      %p98 = pneg %p92
      %p99 = scmp.eq.s32.totalorder %s11, 33
      %p100 = por %p98, %p99
      %p101 = scmp.ne.s32.totalorder %s93, %s96
      %p102 = scmp.eq.s32.totalorder %s11, 0
      %p103 = por %p101, %p102
      %p104 = scmp.ne.s32.totalorder %s93, %s96
      %p105 = scmp.eq.s32.totalorder %s16, 33
      %p106 = por %p104, %p105
      %p107 = scmp.ne.s32.totalorder %s96, %s97
      %p108 = scmp.eq.s32.totalorder %s16, 0
      %p109 = por %p107, %p108
      %p110 = scmp.ne.s32.totalorder %s96, %s97
      %p111 = scmp.eq.s32.totalorder %s17, 33
      %p112 = por %p110, %p111
      %p114 = scmp.ne.s32.totalorder %s97, %s113
      %p115 = scmp.eq.s32.totalorder %s17, 0
      %p116 = por %p114, %p115
      %p117 = scmp.le.s32.totalorder 1, %s11
      %p118 = scmp.lt.s32.totalorder %s11, 35
      %p119 = pnand %p117, %p118
      %p120 = pneg %p119
      // Predicated region
      $region9: #{mlp_forward.1} parent=5 // pred_check
        _
      $region10: #{mlp_forward.1} parent=5 // pred_check_branch
        %122 = sbr.rel (%p119) target = $region12
      $region11: #{mlp_forward.1} parent=5 // pred_region
        %s123 = ssub.s32 %s11, 1
      $region12: #{mlp_forward.1} parent=5 // pred_fallthru
        _
      %p124 = scmp.lt.s32.totalorder %s11, 34
      // Predicated region
      $region13: #{mlp_forward.1} parent=5 // pred_check
        %p125 = pneg %p124
      $region14: #{mlp_forward.1} parent=5 // pred_check_branch
        %127 = sbr.rel (%p125) target = $region16
      $region15: #{mlp_forward.1} parent=5 // pred_region
        // Predicated region
        $region17: #{mlp_forward.1} parent=15 // pred_check
          %p128 = pneg %p47
        $region18: #{mlp_forward.1} parent=15 // pred_check_branch
          %130 = sbr.rel (%p128) target = $region20
        $region19: #{mlp_forward.1} parent=15 // pred_region
          %s131 = smul.u32 %s18, 17
          %s132 = sadd.s32 %s131, %s19
          %s133 = smul.u32 64, %s132
          %p134 = scmp.lt.s32.totalorder %s133, 2175
          %s135 = scalar_select %p134, %s133, 2175
          %s136 = smul.addr %s135, 2
          %s137 = scalar_lea.vmem %s0, %s136
          %s138 = smul.u32 %s18, 17
          %s139 = sadd.s32 %s138, %s19
          %s140 = smul.u32 64, %s139
        $region20: #{mlp_forward.1} parent=15 // pred_fallthru
          _
        // Predicated region
        $region21: #{mlp_forward.1} parent=15 // pred_check
          %p141 = pneg %p77
        $region22: #{mlp_forward.1} parent=15 // pred_check_branch
          %143 = sbr.rel (%p141) target = $region24
        $region23: #{mlp_forward.1} parent=15 // pred_region
          %s144 = sand.u32 %s67, 1
          %s145 = scalar_lea.sflag [#allocation3], %s144
          %s146 = sand.u32 %s67, 1
          %s147 = smul.addr %s146, 8192
          %s148 = scalar_lea.vmem [#allocation2], %s147
          %s149 = smul.u32 %s18, 17
          %s150 = sadd.s32 %s149, %s19
          %s151 = smul.u32 1024, %s150
          %153 = vsyncadd %s145, 0
          %s154 = smul.addr %s151, 8
          %s155 = scalar_lea.hbm %s1, %s154
          %s156 = sshll.u32 %s155, 4
          %s157 = int_to_ptr.hbm [resolvable:$true] %s156
          %s158 = sshll.u32 %s148, 4
          %s159 = int_to_ptr.vmem [resolvable:$true] %s158
          %164 = dma.hbm_to_vmem [thread:$0]  %s157, 131072, %s159, %s145, 128, 128, 8
        $region24: #{mlp_forward.1} parent=15 // pred_fallthru
          _
      $region16: #{mlp_forward.1} parent=5 // pred_fallthru
        _
      %p165 = scmp.le.s32.totalorder 1, %s11
      %p166 = scmp.lt.s32.totalorder %s11, 35
      %p167 = pnand %p165, %p166
      %p168 = pneg %p167
      // Predicated region
      $region25: #{mlp_forward.1} parent=5 // pred_check
        _
      $region26: #{mlp_forward.1} parent=5 // pred_check_branch
        %170 = sbr.rel (%p167) target = $region28
      $region27: #{mlp_forward.1} parent=5 // pred_region
        %s171 = ssub.s32 %s11, 1
        %s172 = sand.u32 %s70, 1
        %s173 = scalar_lea.sflag [#allocation3], %s172
        %s174 = sand.u32 %s70, 1
        %s175 = smul.addr %s174, 8192
        %s176 = scalar_lea.vmem [#allocation2], %s175
        // Predicated region
        $region29: #{mlp_forward.1} parent=27 // pred_check
          %p177 = pneg %p83
        $region30: #{mlp_forward.1} parent=27 // pred_check_branch
          %179 = sbr.rel (%p177) target = $region32
        $region31: #{mlp_forward.1} parent=27 // pred_region
          %181 = dma.done %s173, 131072
        $region32: #{mlp_forward.1} parent=27 // pred_fallthru
          _
        %s182 = smul.u32 %s20, 17
        %s183 = sadd.s32 %s182, %s21
        %s184 = smul.u32 64, %s183
        %p185 = scmp.lt.s32.totalorder %s184, 2175
        %s186 = scalar_select %p185, %s184, 2175
        %s187 = smul.addr %s186, 2
        %s188 = scalar_lea.vmem %s0, %s187
        %p189 = pneg %p53
        %p190 = pneg %p50
        %s191 = sand.u32 %s70, 1
        %s192 = scalar_lea.sflag [#allocation3], %s191
        %s193 = sand.u32 %s70, 1
        %s194 = smul.addr %s193, 8192
        %s195 = scalar_lea.vmem [#allocation2], %s194
        %p196 = pneg %p83
        %p197 = pneg %p80
        %p198 = pneg %p109
        %p199 = pneg %p106
        %p200 = scmp.lt.s32.totalorder %s20, 1
        %s201 = scalar_select %p200, %s20, 1
        %s202 = smul.addr %s201, 2
        %s203 = scalar_lea.vmem %s2, %s202
        %s204 = smul.u32 %s20, 17
        %s205 = sadd.s32 %s204, %s21
        %s206 = smul.u32 64, %s205
        %p207 = scmp.lt.s32.totalorder %s206, 2175
        %s208 = scalar_select %p207, %s206, 2175
        %s209 = smul.addr %s208, 2
        %s210 = scalar_lea.vmem %s0, %s209
        %s211 = smul.u32 %s20, 17
        %s212 = sadd.s32 %s211, %s21
        %s213 = smul.u32 64, %s212
        %s214 = smul.u32 %s20, 17
        %s215 = sadd.s32 %s214, %s21
        %s216 = smul.u32 1024, %s215
        %p217 = scmp.lt.s32.totalorder %s20, 1
        %s218 = scalar_select %p217, %s20, 1
        %s219 = smul.addr %s218, 2
        %s220 = scalar_lea.vmem %s2, %s219
        %p221 = scmp.eq.s32.totalorder %s21, 0
        // Predicated region
        $region33: #{mlp_forward.1} parent=27 // pred_check
          %p222 = pneg %p221
        $region34: #{mlp_forward.1} parent=27 // pred_check_branch
          %224 = sbr.rel (%p222) target = $region36
        $region35: #{mlp_forward.1} parent=27 // pred_region
          %vm225 = vcmask 517120
          %226 = vst.msk [vmem:[%s220] sm:$0x3] %vm225, 0.0
        $region36: #{mlp_forward.1} parent=27 // pred_fallthru
          _
        %v227 = vld [vmem:[%s220] sm:$0x3]
        %v228 = vld [vmem:[%s210] sm:$0xff]
        %v229 = vld [vmem:[%s210 + $0x8] sm:$0xff]
        %v230 = vld [vmem:[%s210 + $0x10] sm:$0xff]
        %v231 = vld [vmem:[%s210 + $0x18] sm:$0xff]
        %v232 = vld [vmem:[%s210 + $0x20] sm:$0xff]
        %v233 = vld [vmem:[%s210 + $0x28] sm:$0xff]
        %v234 = vld [vmem:[%s210 + $0x30] sm:$0xff]
        %v235 = vld [vmem:[%s210 + $0x38] sm:$0xff]
        %v236 = vld [vmem:[%s210 + $0x40] sm:$0xff]
        %v237 = vld [vmem:[%s210 + $0x48] sm:$0xff]
        %v238 = vld [vmem:[%s210 + $0x50] sm:$0xff]
        %v239 = vld [vmem:[%s210 + $0x58] sm:$0xff]
        %v240 = vld [vmem:[%s210 + $0x60] sm:$0xff]
        %v241 = vld [vmem:[%s210 + $0x68] sm:$0xff]
        %v242 = vld [vmem:[%s210 + $0x70] sm:$0xff]
        %v243 = vld [vmem:[%s210 + $0x78] sm:$0xff]
        %v244 = vld [vmem:[%s176] sm:$0xff]
        %v245 = vld [vmem:[%s176 + $0x8] sm:$0xff]
        %v246 = vld [vmem:[%s176 + $0x10] sm:$0xff]
        %v247 = vld [vmem:[%s176 + $0x18] sm:$0xff]
        %v248 = vld [vmem:[%s176 + $0x20] sm:$0xff]
        %v249 = vld [vmem:[%s176 + $0x28] sm:$0xff]
        %v250 = vld [vmem:[%s176 + $0x30] sm:$0xff]
        %v251 = vld [vmem:[%s176 + $0x38] sm:$0xff]
        %v252 = vld [vmem:[%s176 + $0x40] sm:$0xff]
        %v253 = vld [vmem:[%s176 + $0x48] sm:$0xff]
        %v254 = vld [vmem:[%s176 + $0x50] sm:$0xff]
        %v255 = vld [vmem:[%s176 + $0x58] sm:$0xff]
        %v256 = vld [vmem:[%s176 + $0x60] sm:$0xff]
        %v257 = vld [vmem:[%s176 + $0x68] sm:$0xff]
        %v258 = vld [vmem:[%s176 + $0x70] sm:$0xff]
        %v259 = vld [vmem:[%s176 + $0x78] sm:$0xff]
        %v260 = vld [vmem:[%s176 + $0x80] sm:$0xff]
        %v261 = vld [vmem:[%s176 + $0x88] sm:$0xff]
        %v262 = vld [vmem:[%s176 + $0x90] sm:$0xff]
        %v263 = vld [vmem:[%s176 + $0x98] sm:$0xff]
        %v264 = vld [vmem:[%s176 + $0xa0] sm:$0xff]
        %v265 = vld [vmem:[%s176 + $0xa8] sm:$0xff]
        %v266 = vld [vmem:[%s176 + $0xb0] sm:$0xff]
        %v267 = vld [vmem:[%s176 + $0xb8] sm:$0xff]
        %v268 = vld [vmem:[%s176 + $0xc0] sm:$0xff]
        %v269 = vld [vmem:[%s176 + $0xc8] sm:$0xff]
        %v270 = vld [vmem:[%s176 + $0xd0] sm:$0xff]
        %v271 = vld [vmem:[%s176 + $0xd8] sm:$0xff]
        %v272 = vld [vmem:[%s176 + $0xe0] sm:$0xff]
        %v273 = vld [vmem:[%s176 + $0xe8] sm:$0xff]
        %v274 = vld [vmem:[%s176 + $0xf0] sm:$0xff]
        %v275 = vld [vmem:[%s176 + $0xf8] sm:$0xff]
        %v276 = vld [vmem:[%s176 + $0x100] sm:$0xff]
        %v277 = vld [vmem:[%s176 + $0x108] sm:$0xff]
        %v278 = vld [vmem:[%s176 + $0x110] sm:$0xff]
        %v279 = vld [vmem:[%s176 + $0x118] sm:$0xff]
        %v280 = vld [vmem:[%s176 + $0x120] sm:$0xff]
        %v281 = vld [vmem:[%s176 + $0x128] sm:$0xff]
        %v282 = vld [vmem:[%s176 + $0x130] sm:$0xff]
        %v283 = vld [vmem:[%s176 + $0x138] sm:$0xff]
        %v284 = vld [vmem:[%s176 + $0x140] sm:$0xff]
        %v285 = vld [vmem:[%s176 + $0x148] sm:$0xff]
        %v286 = vld [vmem:[%s176 + $0x150] sm:$0xff]
        %v287 = vld [vmem:[%s176 + $0x158] sm:$0xff]
        %v288 = vld [vmem:[%s176 + $0x160] sm:$0xff]
        %v289 = vld [vmem:[%s176 + $0x168] sm:$0xff]
        %v290 = vld [vmem:[%s176 + $0x170] sm:$0xff]
        %v291 = vld [vmem:[%s176 + $0x178] sm:$0xff]
        %v292 = vld [vmem:[%s176 + $0x180] sm:$0xff]
        %v293 = vld [vmem:[%s176 + $0x188] sm:$0xff]
        %v294 = vld [vmem:[%s176 + $0x190] sm:$0xff]
        %v295 = vld [vmem:[%s176 + $0x198] sm:$0xff]
        %v296 = vld [vmem:[%s176 + $0x1a0] sm:$0xff]
        %v297 = vld [vmem:[%s176 + $0x1a8] sm:$0xff]
        %v298 = vld [vmem:[%s176 + $0x1b0] sm:$0xff]
        %v299 = vld [vmem:[%s176 + $0x1b8] sm:$0xff]
        %v300 = vld [vmem:[%s176 + $0x1c0] sm:$0xff]
        %v301 = vld [vmem:[%s176 + $0x1c8] sm:$0xff]
        %v302 = vld [vmem:[%s176 + $0x1d0] sm:$0xff]
        %v303 = vld [vmem:[%s176 + $0x1d8] sm:$0xff]
        %v304 = vld [vmem:[%s176 + $0x1e0] sm:$0xff]
        %v305 = vld [vmem:[%s176 + $0x1e8] sm:$0xff]
        %v306 = vld [vmem:[%s176 + $0x1f0] sm:$0xff]
        %v307 = vld [vmem:[%s176 + $0x1f8] sm:$0xff]
        %v308 = vld [vmem:[%s176 + $0x200] sm:$0xff]
        %v309 = vld [vmem:[%s176 + $0x208] sm:$0xff]
        %v310 = vld [vmem:[%s176 + $0x210] sm:$0xff]
        %v311 = vld [vmem:[%s176 + $0x218] sm:$0xff]
        %v312 = vld [vmem:[%s176 + $0x220] sm:$0xff]
        %v313 = vld [vmem:[%s176 + $0x228] sm:$0xff]
        %v314 = vld [vmem:[%s176 + $0x230] sm:$0xff]
        %v315 = vld [vmem:[%s176 + $0x238] sm:$0xff]
        %v316 = vld [vmem:[%s176 + $0x240] sm:$0xff]
        %v317 = vld [vmem:[%s176 + $0x248] sm:$0xff]
        %v318 = vld [vmem:[%s176 + $0x250] sm:$0xff]
        %v319 = vld [vmem:[%s176 + $0x258] sm:$0xff]
        %v320 = vld [vmem:[%s176 + $0x260] sm:$0xff]
        %v321 = vld [vmem:[%s176 + $0x268] sm:$0xff]
        %v322 = vld [vmem:[%s176 + $0x270] sm:$0xff]
        %v323 = vld [vmem:[%s176 + $0x278] sm:$0xff]
        %v324 = vld [vmem:[%s176 + $0x280] sm:$0xff]
        %v325 = vld [vmem:[%s176 + $0x288] sm:$0xff]
        %v326 = vld [vmem:[%s176 + $0x290] sm:$0xff]
        %v327 = vld [vmem:[%s176 + $0x298] sm:$0xff]
        %v328 = vld [vmem:[%s176 + $0x2a0] sm:$0xff]
        %v329 = vld [vmem:[%s176 + $0x2a8] sm:$0xff]
        %v330 = vld [vmem:[%s176 + $0x2b0] sm:$0xff]
        %v331 = vld [vmem:[%s176 + $0x2b8] sm:$0xff]
        %v332 = vld [vmem:[%s176 + $0x2c0] sm:$0xff]
        %v333 = vld [vmem:[%s176 + $0x2c8] sm:$0xff]
        %v334 = vld [vmem:[%s176 + $0x2d0] sm:$0xff]
        %v335 = vld [vmem:[%s176 + $0x2d8] sm:$0xff]
        %v336 = vld [vmem:[%s176 + $0x2e0] sm:$0xff]
        %v337 = vld [vmem:[%s176 + $0x2e8] sm:$0xff]
        %v338 = vld [vmem:[%s176 + $0x2f0] sm:$0xff]
        %v339 = vld [vmem:[%s176 + $0x2f8] sm:$0xff]
        %v340 = vld [vmem:[%s176 + $0x300] sm:$0xff]
        %v341 = vld [vmem:[%s176 + $0x308] sm:$0xff]
        %v342 = vld [vmem:[%s176 + $0x310] sm:$0xff]
        %v343 = vld [vmem:[%s176 + $0x318] sm:$0xff]
        %v344 = vld [vmem:[%s176 + $0x320] sm:$0xff]
        %v345 = vld [vmem:[%s176 + $0x328] sm:$0xff]
        %v346 = vld [vmem:[%s176 + $0x330] sm:$0xff]
        %v347 = vld [vmem:[%s176 + $0x338] sm:$0xff]
        %v348 = vld [vmem:[%s176 + $0x340] sm:$0xff]
        %v349 = vld [vmem:[%s176 + $0x348] sm:$0xff]
        %v350 = vld [vmem:[%s176 + $0x350] sm:$0xff]
        %v351 = vld [vmem:[%s176 + $0x358] sm:$0xff]
        %v352 = vld [vmem:[%s176 + $0x360] sm:$0xff]
        %v353 = vld [vmem:[%s176 + $0x368] sm:$0xff]
        %v354 = vld [vmem:[%s176 + $0x370] sm:$0xff]
        %v355 = vld [vmem:[%s176 + $0x378] sm:$0xff]
        %v356 = vld [vmem:[%s176 + $0x380] sm:$0xff]
        %v357 = vld [vmem:[%s176 + $0x388] sm:$0xff]
        %v358 = vld [vmem:[%s176 + $0x390] sm:$0xff]
        %v359 = vld [vmem:[%s176 + $0x398] sm:$0xff]
        %v360 = vld [vmem:[%s176 + $0x3a0] sm:$0xff]
        %v361 = vld [vmem:[%s176 + $0x3a8] sm:$0xff]
        %v362 = vld [vmem:[%s176 + $0x3b0] sm:$0xff]
        %v363 = vld [vmem:[%s176 + $0x3b8] sm:$0xff]
        %v364 = vld [vmem:[%s176 + $0x3c0] sm:$0xff]
        %v365 = vld [vmem:[%s176 + $0x3c8] sm:$0xff]
        %v366 = vld [vmem:[%s176 + $0x3d0] sm:$0xff]
        %v367 = vld [vmem:[%s176 + $0x3d8] sm:$0xff]
        %v368 = vld [vmem:[%s176 + $0x3e0] sm:$0xff]
        %v369 = vld [vmem:[%s176 + $0x3e8] sm:$0xff]
        %v370 = vld [vmem:[%s176 + $0x3f0] sm:$0xff]
        %v371 = vld [vmem:[%s176 + $0x3f8] sm:$0xff]
        %v372 = vld [vmem:[%s176 + $0x400] sm:$0xff]
        %v373 = vld [vmem:[%s176 + $0x408] sm:$0xff]
        %v374 = vld [vmem:[%s176 + $0x410] sm:$0xff]
        %v375 = vld [vmem:[%s176 + $0x418] sm:$0xff]
        %v376 = vld [vmem:[%s176 + $0x420] sm:$0xff]
        %v377 = vld [vmem:[%s176 + $0x428] sm:$0xff]
        %v378 = vld [vmem:[%s176 + $0x430] sm:$0xff]
        %v379 = vld [vmem:[%s176 + $0x438] sm:$0xff]
        %v380 = vld [vmem:[%s176 + $0x440] sm:$0xff]
        %v381 = vld [vmem:[%s176 + $0x448] sm:$0xff]
        %v382 = vld [vmem:[%s176 + $0x450] sm:$0xff]
        %v383 = vld [vmem:[%s176 + $0x458] sm:$0xff]
        %v384 = vld [vmem:[%s176 + $0x460] sm:$0xff]
        %v385 = vld [vmem:[%s176 + $0x468] sm:$0xff]
        %v386 = vld [vmem:[%s176 + $0x470] sm:$0xff]
        %v387 = vld [vmem:[%s176 + $0x478] sm:$0xff]
        %v388 = vld [vmem:[%s176 + $0x480] sm:$0xff]
        %v389 = vld [vmem:[%s176 + $0x488] sm:$0xff]
        %v390 = vld [vmem:[%s176 + $0x490] sm:$0xff]
        %v391 = vld [vmem:[%s176 + $0x498] sm:$0xff]
        %v392 = vld [vmem:[%s176 + $0x4a0] sm:$0xff]
        %v393 = vld [vmem:[%s176 + $0x4a8] sm:$0xff]
        %v394 = vld [vmem:[%s176 + $0x4b0] sm:$0xff]
        %v395 = vld [vmem:[%s176 + $0x4b8] sm:$0xff]
        %v396 = vld [vmem:[%s176 + $0x4c0] sm:$0xff]
        %v397 = vld [vmem:[%s176 + $0x4c8] sm:$0xff]
        %v398 = vld [vmem:[%s176 + $0x4d0] sm:$0xff]
        %v399 = vld [vmem:[%s176 + $0x4d8] sm:$0xff]
        %v400 = vld [vmem:[%s176 + $0x4e0] sm:$0xff]
        %v401 = vld [vmem:[%s176 + $0x4e8] sm:$0xff]
        %v402 = vld [vmem:[%s176 + $0x4f0] sm:$0xff]
        %v403 = vld [vmem:[%s176 + $0x4f8] sm:$0xff]
        %v404 = vld [vmem:[%s176 + $0x500] sm:$0xff]
        %v405 = vld [vmem:[%s176 + $0x508] sm:$0xff]
        %v406 = vld [vmem:[%s176 + $0x510] sm:$0xff]
        %v407 = vld [vmem:[%s176 + $0x518] sm:$0xff]
        %v408 = vld [vmem:[%s176 + $0x520] sm:$0xff]
        %v409 = vld [vmem:[%s176 + $0x528] sm:$0xff]
        %v410 = vld [vmem:[%s176 + $0x530] sm:$0xff]
        %v411 = vld [vmem:[%s176 + $0x538] sm:$0xff]
        %v412 = vld [vmem:[%s176 + $0x540] sm:$0xff]
        %v413 = vld [vmem:[%s176 + $0x548] sm:$0xff]
        %v414 = vld [vmem:[%s176 + $0x550] sm:$0xff]
        %v415 = vld [vmem:[%s176 + $0x558] sm:$0xff]
        %v416 = vld [vmem:[%s176 + $0x560] sm:$0xff]
        %v417 = vld [vmem:[%s176 + $0x568] sm:$0xff]
        %v418 = vld [vmem:[%s176 + $0x570] sm:$0xff]
        %v419 = vld [vmem:[%s176 + $0x578] sm:$0xff]
        %v420 = vld [vmem:[%s176 + $0x580] sm:$0xff]
        %v421 = vld [vmem:[%s176 + $0x588] sm:$0xff]
        %v422 = vld [vmem:[%s176 + $0x590] sm:$0xff]
        %v423 = vld [vmem:[%s176 + $0x598] sm:$0xff]
        %v424 = vld [vmem:[%s176 + $0x5a0] sm:$0xff]
        %v425 = vld [vmem:[%s176 + $0x5a8] sm:$0xff]
        %v426 = vld [vmem:[%s176 + $0x5b0] sm:$0xff]
        %v427 = vld [vmem:[%s176 + $0x5b8] sm:$0xff]
        %v428 = vld [vmem:[%s176 + $0x5c0] sm:$0xff]
        %v429 = vld [vmem:[%s176 + $0x5c8] sm:$0xff]
        %v430 = vld [vmem:[%s176 + $0x5d0] sm:$0xff]
        %v431 = vld [vmem:[%s176 + $0x5d8] sm:$0xff]
        %v432 = vld [vmem:[%s176 + $0x5e0] sm:$0xff]
        %v433 = vld [vmem:[%s176 + $0x5e8] sm:$0xff]
        %v434 = vld [vmem:[%s176 + $0x5f0] sm:$0xff]
        %v435 = vld [vmem:[%s176 + $0x5f8] sm:$0xff]
        %v436 = vld [vmem:[%s176 + $0x600] sm:$0xff]
        %v437 = vld [vmem:[%s176 + $0x608] sm:$0xff]
        %v438 = vld [vmem:[%s176 + $0x610] sm:$0xff]
        %v439 = vld [vmem:[%s176 + $0x618] sm:$0xff]
        %v440 = vld [vmem:[%s176 + $0x620] sm:$0xff]
        %v441 = vld [vmem:[%s176 + $0x628] sm:$0xff]
        %v442 = vld [vmem:[%s176 + $0x630] sm:$0xff]
        %v443 = vld [vmem:[%s176 + $0x638] sm:$0xff]
        %v444 = vld [vmem:[%s176 + $0x640] sm:$0xff]
        %v445 = vld [vmem:[%s176 + $0x648] sm:$0xff]
        %v446 = vld [vmem:[%s176 + $0x650] sm:$0xff]
        %v447 = vld [vmem:[%s176 + $0x658] sm:$0xff]
        %v448 = vld [vmem:[%s176 + $0x660] sm:$0xff]
        %v449 = vld [vmem:[%s176 + $0x668] sm:$0xff]
        %v450 = vld [vmem:[%s176 + $0x670] sm:$0xff]
        %v451 = vld [vmem:[%s176 + $0x678] sm:$0xff]
        %v452 = vld [vmem:[%s176 + $0x680] sm:$0xff]
        %v453 = vld [vmem:[%s176 + $0x688] sm:$0xff]
        %v454 = vld [vmem:[%s176 + $0x690] sm:$0xff]
        %v455 = vld [vmem:[%s176 + $0x698] sm:$0xff]
        %v456 = vld [vmem:[%s176 + $0x6a0] sm:$0xff]
        %v457 = vld [vmem:[%s176 + $0x6a8] sm:$0xff]
        %v458 = vld [vmem:[%s176 + $0x6b0] sm:$0xff]
        %v459 = vld [vmem:[%s176 + $0x6b8] sm:$0xff]
        %v460 = vld [vmem:[%s176 + $0x6c0] sm:$0xff]
        %v461 = vld [vmem:[%s176 + $0x6c8] sm:$0xff]
        %v462 = vld [vmem:[%s176 + $0x6d0] sm:$0xff]
        %v463 = vld [vmem:[%s176 + $0x6d8] sm:$0xff]
        %v464 = vld [vmem:[%s176 + $0x6e0] sm:$0xff]
        %v465 = vld [vmem:[%s176 + $0x6e8] sm:$0xff]
        %v466 = vld [vmem:[%s176 + $0x6f0] sm:$0xff]
        %v467 = vld [vmem:[%s176 + $0x6f8] sm:$0xff]
        %v468 = vld [vmem:[%s176 + $0x700] sm:$0xff]
        %v469 = vld [vmem:[%s176 + $0x708] sm:$0xff]
        %v470 = vld [vmem:[%s176 + $0x710] sm:$0xff]
        %v471 = vld [vmem:[%s176 + $0x718] sm:$0xff]
        %v472 = vld [vmem:[%s176 + $0x720] sm:$0xff]
        %v473 = vld [vmem:[%s176 + $0x728] sm:$0xff]
        %v474 = vld [vmem:[%s176 + $0x730] sm:$0xff]
        %v475 = vld [vmem:[%s176 + $0x738] sm:$0xff]
        %v476 = vld [vmem:[%s176 + $0x740] sm:$0xff]
        %v477 = vld [vmem:[%s176 + $0x748] sm:$0xff]
        %v478 = vld [vmem:[%s176 + $0x750] sm:$0xff]
        %v479 = vld [vmem:[%s176 + $0x758] sm:$0xff]
        %v480 = vld [vmem:[%s176 + $0x760] sm:$0xff]
        %v481 = vld [vmem:[%s176 + $0x768] sm:$0xff]
        %v482 = vld [vmem:[%s176 + $0x770] sm:$0xff]
        %v483 = vld [vmem:[%s176 + $0x778] sm:$0xff]
        %v484 = vld [vmem:[%s176 + $0x780] sm:$0xff]
        %v485 = vld [vmem:[%s176 + $0x788] sm:$0xff]
        %v486 = vld [vmem:[%s176 + $0x790] sm:$0xff]
        %v487 = vld [vmem:[%s176 + $0x798] sm:$0xff]
        %v488 = vld [vmem:[%s176 + $0x7a0] sm:$0xff]
        %v489 = vld [vmem:[%s176 + $0x7a8] sm:$0xff]
        %v490 = vld [vmem:[%s176 + $0x7b0] sm:$0xff]
        %v491 = vld [vmem:[%s176 + $0x7b8] sm:$0xff]
        %v492 = vld [vmem:[%s176 + $0x7c0] sm:$0xff]
        %v493 = vld [vmem:[%s176 + $0x7c8] sm:$0xff]
        %v494 = vld [vmem:[%s176 + $0x7d0] sm:$0xff]
        %v495 = vld [vmem:[%s176 + $0x7d8] sm:$0xff]
        %v496 = vld [vmem:[%s176 + $0x7e0] sm:$0xff]
        %v497 = vld [vmem:[%s176 + $0x7e8] sm:$0xff]
        %v498 = vld [vmem:[%s176 + $0x7f0] sm:$0xff]
        %v499 = vld [vmem:[%s176 + $0x7f8] sm:$0xff]
        %v500 = vld [vmem:[%s176 + $0x800] sm:$0xff]
        %v501 = vld [vmem:[%s176 + $0x808] sm:$0xff]
        %v502 = vld [vmem:[%s176 + $0x810] sm:$0xff]
        %v503 = vld [vmem:[%s176 + $0x818] sm:$0xff]
        %v504 = vld [vmem:[%s176 + $0x820] sm:$0xff]
        %v505 = vld [vmem:[%s176 + $0x828] sm:$0xff]
        %v506 = vld [vmem:[%s176 + $0x830] sm:$0xff]
        %v507 = vld [vmem:[%s176 + $0x838] sm:$0xff]
        %v508 = vld [vmem:[%s176 + $0x840] sm:$0xff]
        %v509 = vld [vmem:[%s176 + $0x848] sm:$0xff]
        %v510 = vld [vmem:[%s176 + $0x850] sm:$0xff]
        %v511 = vld [vmem:[%s176 + $0x858] sm:$0xff]
        %v512 = vld [vmem:[%s176 + $0x860] sm:$0xff]
        %v513 = vld [vmem:[%s176 + $0x868] sm:$0xff]
        %v514 = vld [vmem:[%s176 + $0x870] sm:$0xff]
        %v515 = vld [vmem:[%s176 + $0x878] sm:$0xff]
        %v516 = vld [vmem:[%s176 + $0x880] sm:$0xff]
        %v517 = vld [vmem:[%s176 + $0x888] sm:$0xff]
        %v518 = vld [vmem:[%s176 + $0x890] sm:$0xff]
        %v519 = vld [vmem:[%s176 + $0x898] sm:$0xff]
        %v520 = vld [vmem:[%s176 + $0x8a0] sm:$0xff]
        %v521 = vld [vmem:[%s176 + $0x8a8] sm:$0xff]
        %v522 = vld [vmem:[%s176 + $0x8b0] sm:$0xff]
        %v523 = vld [vmem:[%s176 + $0x8b8] sm:$0xff]
        %v524 = vld [vmem:[%s176 + $0x8c0] sm:$0xff]
        %v525 = vld [vmem:[%s176 + $0x8c8] sm:$0xff]
        %v526 = vld [vmem:[%s176 + $0x8d0] sm:$0xff]
        %v527 = vld [vmem:[%s176 + $0x8d8] sm:$0xff]
        %v528 = vld [vmem:[%s176 + $0x8e0] sm:$0xff]
        %v529 = vld [vmem:[%s176 + $0x8e8] sm:$0xff]
        %v530 = vld [vmem:[%s176 + $0x8f0] sm:$0xff]
        %v531 = vld [vmem:[%s176 + $0x8f8] sm:$0xff]
        %v532 = vld [vmem:[%s176 + $0x900] sm:$0xff]
        %v533 = vld [vmem:[%s176 + $0x908] sm:$0xff]
        %v534 = vld [vmem:[%s176 + $0x910] sm:$0xff]
        %v535 = vld [vmem:[%s176 + $0x918] sm:$0xff]
        %v536 = vld [vmem:[%s176 + $0x920] sm:$0xff]
        %v537 = vld [vmem:[%s176 + $0x928] sm:$0xff]
        %v538 = vld [vmem:[%s176 + $0x930] sm:$0xff]
        %v539 = vld [vmem:[%s176 + $0x938] sm:$0xff]
        %v540 = vld [vmem:[%s176 + $0x940] sm:$0xff]
        %v541 = vld [vmem:[%s176 + $0x948] sm:$0xff]
        %v542 = vld [vmem:[%s176 + $0x950] sm:$0xff]
        %v543 = vld [vmem:[%s176 + $0x958] sm:$0xff]
        %v544 = vld [vmem:[%s176 + $0x960] sm:$0xff]
        %v545 = vld [vmem:[%s176 + $0x968] sm:$0xff]
        %v546 = vld [vmem:[%s176 + $0x970] sm:$0xff]
        %v547 = vld [vmem:[%s176 + $0x978] sm:$0xff]
        %v548 = vld [vmem:[%s176 + $0x980] sm:$0xff]
        %v549 = vld [vmem:[%s176 + $0x988] sm:$0xff]
        %v550 = vld [vmem:[%s176 + $0x990] sm:$0xff]
        %v551 = vld [vmem:[%s176 + $0x998] sm:$0xff]
        %v552 = vld [vmem:[%s176 + $0x9a0] sm:$0xff]
        %v553 = vld [vmem:[%s176 + $0x9a8] sm:$0xff]
        %v554 = vld [vmem:[%s176 + $0x9b0] sm:$0xff]
        %v555 = vld [vmem:[%s176 + $0x9b8] sm:$0xff]
        %v556 = vld [vmem:[%s176 + $0x9c0] sm:$0xff]
        %v557 = vld [vmem:[%s176 + $0x9c8] sm:$0xff]
        %v558 = vld [vmem:[%s176 + $0x9d0] sm:$0xff]
        %v559 = vld [vmem:[%s176 + $0x9d8] sm:$0xff]
        %v560 = vld [vmem:[%s176 + $0x9e0] sm:$0xff]
        %v561 = vld [vmem:[%s176 + $0x9e8] sm:$0xff]
        %v562 = vld [vmem:[%s176 + $0x9f0] sm:$0xff]
        %v563 = vld [vmem:[%s176 + $0x9f8] sm:$0xff]
        %v564 = vld [vmem:[%s176 + $0xa00] sm:$0xff]
        %v565 = vld [vmem:[%s176 + $0xa08] sm:$0xff]
        %v566 = vld [vmem:[%s176 + $0xa10] sm:$0xff]
        %v567 = vld [vmem:[%s176 + $0xa18] sm:$0xff]
        %v568 = vld [vmem:[%s176 + $0xa20] sm:$0xff]
        %v569 = vld [vmem:[%s176 + $0xa28] sm:$0xff]
        %v570 = vld [vmem:[%s176 + $0xa30] sm:$0xff]
        %v571 = vld [vmem:[%s176 + $0xa38] sm:$0xff]
        %v572 = vld [vmem:[%s176 + $0xa40] sm:$0xff]
        %v573 = vld [vmem:[%s176 + $0xa48] sm:$0xff]
        %v574 = vld [vmem:[%s176 + $0xa50] sm:$0xff]
        %v575 = vld [vmem:[%s176 + $0xa58] sm:$0xff]
        %v576 = vld [vmem:[%s176 + $0xa60] sm:$0xff]
        %v577 = vld [vmem:[%s176 + $0xa68] sm:$0xff]
        %v578 = vld [vmem:[%s176 + $0xa70] sm:$0xff]
        %v579 = vld [vmem:[%s176 + $0xa78] sm:$0xff]
        %v580 = vld [vmem:[%s176 + $0xa80] sm:$0xff]
        %v581 = vld [vmem:[%s176 + $0xa88] sm:$0xff]
        %v582 = vld [vmem:[%s176 + $0xa90] sm:$0xff]
        %v583 = vld [vmem:[%s176 + $0xa98] sm:$0xff]
        %v584 = vld [vmem:[%s176 + $0xaa0] sm:$0xff]
        %v585 = vld [vmem:[%s176 + $0xaa8] sm:$0xff]
        %v586 = vld [vmem:[%s176 + $0xab0] sm:$0xff]
        %v587 = vld [vmem:[%s176 + $0xab8] sm:$0xff]
        %v588 = vld [vmem:[%s176 + $0xac0] sm:$0xff]
        %v589 = vld [vmem:[%s176 + $0xac8] sm:$0xff]
        %v590 = vld [vmem:[%s176 + $0xad0] sm:$0xff]
        %v591 = vld [vmem:[%s176 + $0xad8] sm:$0xff]
        %v592 = vld [vmem:[%s176 + $0xae0] sm:$0xff]
        %v593 = vld [vmem:[%s176 + $0xae8] sm:$0xff]
        %v594 = vld [vmem:[%s176 + $0xaf0] sm:$0xff]
        %v595 = vld [vmem:[%s176 + $0xaf8] sm:$0xff]
        %v596 = vld [vmem:[%s176 + $0xb00] sm:$0xff]
        %v597 = vld [vmem:[%s176 + $0xb08] sm:$0xff]
        %v598 = vld [vmem:[%s176 + $0xb10] sm:$0xff]
        %v599 = vld [vmem:[%s176 + $0xb18] sm:$0xff]
        %v600 = vld [vmem:[%s176 + $0xb20] sm:$0xff]
        %v601 = vld [vmem:[%s176 + $0xb28] sm:$0xff]
        %v602 = vld [vmem:[%s176 + $0xb30] sm:$0xff]
        %v603 = vld [vmem:[%s176 + $0xb38] sm:$0xff]
        %v604 = vld [vmem:[%s176 + $0xb40] sm:$0xff]
        %v605 = vld [vmem:[%s176 + $0xb48] sm:$0xff]
        %v606 = vld [vmem:[%s176 + $0xb50] sm:$0xff]
        %v607 = vld [vmem:[%s176 + $0xb58] sm:$0xff]
        %v608 = vld [vmem:[%s176 + $0xb60] sm:$0xff]
        %v609 = vld [vmem:[%s176 + $0xb68] sm:$0xff]
        %v610 = vld [vmem:[%s176 + $0xb70] sm:$0xff]
        %v611 = vld [vmem:[%s176 + $0xb78] sm:$0xff]
        %v612 = vld [vmem:[%s176 + $0xb80] sm:$0xff]
        %v613 = vld [vmem:[%s176 + $0xb88] sm:$0xff]
        %v614 = vld [vmem:[%s176 + $0xb90] sm:$0xff]
        %v615 = vld [vmem:[%s176 + $0xb98] sm:$0xff]
        %v616 = vld [vmem:[%s176 + $0xba0] sm:$0xff]
        %v617 = vld [vmem:[%s176 + $0xba8] sm:$0xff]
        %v618 = vld [vmem:[%s176 + $0xbb0] sm:$0xff]
        %v619 = vld [vmem:[%s176 + $0xbb8] sm:$0xff]
        %v620 = vld [vmem:[%s176 + $0xbc0] sm:$0xff]
        %v621 = vld [vmem:[%s176 + $0xbc8] sm:$0xff]
        %v622 = vld [vmem:[%s176 + $0xbd0] sm:$0xff]
        %v623 = vld [vmem:[%s176 + $0xbd8] sm:$0xff]
        %v624 = vld [vmem:[%s176 + $0xbe0] sm:$0xff]
        %v625 = vld [vmem:[%s176 + $0xbe8] sm:$0xff]
        %v626 = vld [vmem:[%s176 + $0xbf0] sm:$0xff]
        %v627 = vld [vmem:[%s176 + $0xbf8] sm:$0xff]
        %v628 = vld [vmem:[%s176 + $0xc00] sm:$0xff]
        %v629 = vld [vmem:[%s176 + $0xc08] sm:$0xff]
        %v630 = vld [vmem:[%s176 + $0xc10] sm:$0xff]
        %v631 = vld [vmem:[%s176 + $0xc18] sm:$0xff]
        %v632 = vld [vmem:[%s176 + $0xc20] sm:$0xff]
        %v633 = vld [vmem:[%s176 + $0xc28] sm:$0xff]
        %v634 = vld [vmem:[%s176 + $0xc30] sm:$0xff]
        %v635 = vld [vmem:[%s176 + $0xc38] sm:$0xff]
        %v636 = vld [vmem:[%s176 + $0xc40] sm:$0xff]
        %v637 = vld [vmem:[%s176 + $0xc48] sm:$0xff]
        %v638 = vld [vmem:[%s176 + $0xc50] sm:$0xff]
        %v639 = vld [vmem:[%s176 + $0xc58] sm:$0xff]
        %v640 = vld [vmem:[%s176 + $0xc60] sm:$0xff]
        %v641 = vld [vmem:[%s176 + $0xc68] sm:$0xff]
        %v642 = vld [vmem:[%s176 + $0xc70] sm:$0xff]
        %v643 = vld [vmem:[%s176 + $0xc78] sm:$0xff]
        %v644 = vld [vmem:[%s176 + $0xc80] sm:$0xff]
        %v645 = vld [vmem:[%s176 + $0xc88] sm:$0xff]
        %v646 = vld [vmem:[%s176 + $0xc90] sm:$0xff]
        %v647 = vld [vmem:[%s176 + $0xc98] sm:$0xff]
        %v648 = vld [vmem:[%s176 + $0xca0] sm:$0xff]
        %v649 = vld [vmem:[%s176 + $0xca8] sm:$0xff]
        %v650 = vld [vmem:[%s176 + $0xcb0] sm:$0xff]
        %v651 = vld [vmem:[%s176 + $0xcb8] sm:$0xff]
        %v652 = vld [vmem:[%s176 + $0xcc0] sm:$0xff]
        %v653 = vld [vmem:[%s176 + $0xcc8] sm:$0xff]
        %v654 = vld [vmem:[%s176 + $0xcd0] sm:$0xff]
        %v655 = vld [vmem:[%s176 + $0xcd8] sm:$0xff]
        %v656 = vld [vmem:[%s176 + $0xce0] sm:$0xff]
        %v657 = vld [vmem:[%s176 + $0xce8] sm:$0xff]
        %v658 = vld [vmem:[%s176 + $0xcf0] sm:$0xff]
        %v659 = vld [vmem:[%s176 + $0xcf8] sm:$0xff]
        %v660 = vld [vmem:[%s176 + $0xd00] sm:$0xff]
        %v661 = vld [vmem:[%s176 + $0xd08] sm:$0xff]
        %v662 = vld [vmem:[%s176 + $0xd10] sm:$0xff]
        %v663 = vld [vmem:[%s176 + $0xd18] sm:$0xff]
        %v664 = vld [vmem:[%s176 + $0xd20] sm:$0xff]
        %v665 = vld [vmem:[%s176 + $0xd28] sm:$0xff]
        %v666 = vld [vmem:[%s176 + $0xd30] sm:$0xff]
        %v667 = vld [vmem:[%s176 + $0xd38] sm:$0xff]
        %v668 = vld [vmem:[%s176 + $0xd40] sm:$0xff]
        %v669 = vld [vmem:[%s176 + $0xd48] sm:$0xff]
        %v670 = vld [vmem:[%s176 + $0xd50] sm:$0xff]
        %v671 = vld [vmem:[%s176 + $0xd58] sm:$0xff]
        %v672 = vld [vmem:[%s176 + $0xd60] sm:$0xff]
        %v673 = vld [vmem:[%s176 + $0xd68] sm:$0xff]
        %v674 = vld [vmem:[%s176 + $0xd70] sm:$0xff]
        %v675 = vld [vmem:[%s176 + $0xd78] sm:$0xff]
        %v676 = vld [vmem:[%s176 + $0xd80] sm:$0xff]
        %v677 = vld [vmem:[%s176 + $0xd88] sm:$0xff]
        %v678 = vld [vmem:[%s176 + $0xd90] sm:$0xff]
        %v679 = vld [vmem:[%s176 + $0xd98] sm:$0xff]
        %v680 = vld [vmem:[%s176 + $0xda0] sm:$0xff]
        %v681 = vld [vmem:[%s176 + $0xda8] sm:$0xff]
        %v682 = vld [vmem:[%s176 + $0xdb0] sm:$0xff]
        %v683 = vld [vmem:[%s176 + $0xdb8] sm:$0xff]
        %v684 = vld [vmem:[%s176 + $0xdc0] sm:$0xff]
        %v685 = vld [vmem:[%s176 + $0xdc8] sm:$0xff]
        %v686 = vld [vmem:[%s176 + $0xdd0] sm:$0xff]
        %v687 = vld [vmem:[%s176 + $0xdd8] sm:$0xff]
        %v688 = vld [vmem:[%s176 + $0xde0] sm:$0xff]
        %v689 = vld [vmem:[%s176 + $0xde8] sm:$0xff]
        %v690 = vld [vmem:[%s176 + $0xdf0] sm:$0xff]
        %v691 = vld [vmem:[%s176 + $0xdf8] sm:$0xff]
        %v692 = vld [vmem:[%s176 + $0xe00] sm:$0xff]
        %v693 = vld [vmem:[%s176 + $0xe08] sm:$0xff]
        %v694 = vld [vmem:[%s176 + $0xe10] sm:$0xff]
        %v695 = vld [vmem:[%s176 + $0xe18] sm:$0xff]
        %v696 = vld [vmem:[%s176 + $0xe20] sm:$0xff]
        %v697 = vld [vmem:[%s176 + $0xe28] sm:$0xff]
        %v698 = vld [vmem:[%s176 + $0xe30] sm:$0xff]
        %v699 = vld [vmem:[%s176 + $0xe38] sm:$0xff]
        %v700 = vld [vmem:[%s176 + $0xe40] sm:$0xff]
        %v701 = vld [vmem:[%s176 + $0xe48] sm:$0xff]
        %v702 = vld [vmem:[%s176 + $0xe50] sm:$0xff]
        %v703 = vld [vmem:[%s176 + $0xe58] sm:$0xff]
        %v704 = vld [vmem:[%s176 + $0xe60] sm:$0xff]
        %v705 = vld [vmem:[%s176 + $0xe68] sm:$0xff]
        %v706 = vld [vmem:[%s176 + $0xe70] sm:$0xff]
        %v707 = vld [vmem:[%s176 + $0xe78] sm:$0xff]
        %v708 = vld [vmem:[%s176 + $0xe80] sm:$0xff]
        %v709 = vld [vmem:[%s176 + $0xe88] sm:$0xff]
        %v710 = vld [vmem:[%s176 + $0xe90] sm:$0xff]
        %v711 = vld [vmem:[%s176 + $0xe98] sm:$0xff]
        %v712 = vld [vmem:[%s176 + $0xea0] sm:$0xff]
        %v713 = vld [vmem:[%s176 + $0xea8] sm:$0xff]
        %v714 = vld [vmem:[%s176 + $0xeb0] sm:$0xff]
        %v715 = vld [vmem:[%s176 + $0xeb8] sm:$0xff]
        %v716 = vld [vmem:[%s176 + $0xec0] sm:$0xff]
        %v717 = vld [vmem:[%s176 + $0xec8] sm:$0xff]
        %v718 = vld [vmem:[%s176 + $0xed0] sm:$0xff]
        %v719 = vld [vmem:[%s176 + $0xed8] sm:$0xff]
        %v720 = vld [vmem:[%s176 + $0xee0] sm:$0xff]
        %v721 = vld [vmem:[%s176 + $0xee8] sm:$0xff]
        %v722 = vld [vmem:[%s176 + $0xef0] sm:$0xff]
        %v723 = vld [vmem:[%s176 + $0xef8] sm:$0xff]
        %v724 = vld [vmem:[%s176 + $0xf00] sm:$0xff]
        %v725 = vld [vmem:[%s176 + $0xf08] sm:$0xff]
        %v726 = vld [vmem:[%s176 + $0xf10] sm:$0xff]
        %v727 = vld [vmem:[%s176 + $0xf18] sm:$0xff]
        %v728 = vld [vmem:[%s176 + $0xf20] sm:$0xff]
        %v729 = vld [vmem:[%s176 + $0xf28] sm:$0xff]
        %v730 = vld [vmem:[%s176 + $0xf30] sm:$0xff]
        %v731 = vld [vmem:[%s176 + $0xf38] sm:$0xff]
        %v732 = vld [vmem:[%s176 + $0xf40] sm:$0xff]
        %v733 = vld [vmem:[%s176 + $0xf48] sm:$0xff]
        %v734 = vld [vmem:[%s176 + $0xf50] sm:$0xff]
        %v735 = vld [vmem:[%s176 + $0xf58] sm:$0xff]
        %v736 = vld [vmem:[%s176 + $0xf60] sm:$0xff]
        %v737 = vld [vmem:[%s176 + $0xf68] sm:$0xff]
        %v738 = vld [vmem:[%s176 + $0xf70] sm:$0xff]
        %v739 = vld [vmem:[%s176 + $0xf78] sm:$0xff]
        %v740 = vld [vmem:[%s176 + $0xf80] sm:$0xff]
        %v741 = vld [vmem:[%s176 + $0xf88] sm:$0xff]
        %v742 = vld [vmem:[%s176 + $0xf90] sm:$0xff]
        %v743 = vld [vmem:[%s176 + $0xf98] sm:$0xff]
        %v744 = vld [vmem:[%s176 + $0xfa0] sm:$0xff]
        %v745 = vld [vmem:[%s176 + $0xfa8] sm:$0xff]
        %v746 = vld [vmem:[%s176 + $0xfb0] sm:$0xff]
        %v747 = vld [vmem:[%s176 + $0xfb8] sm:$0xff]
        %v748 = vld [vmem:[%s176 + $0xfc0] sm:$0xff]
        %v749 = vld [vmem:[%s176 + $0xfc8] sm:$0xff]
        %v750 = vld [vmem:[%s176 + $0xfd0] sm:$0xff]
        %v751 = vld [vmem:[%s176 + $0xfd8] sm:$0xff]
        %v752 = vld [vmem:[%s176 + $0xfe0] sm:$0xff]
        %v753 = vld [vmem:[%s176 + $0xfe8] sm:$0xff]
        %v754 = vld [vmem:[%s176 + $0xff0] sm:$0xff]
        %v755 = vld [vmem:[%s176 + $0xff8] sm:$0xff]
        %v756 = vld [vmem:[%s176 + $0x1000] sm:$0xff]
        %v757 = vld [vmem:[%s176 + $0x1008] sm:$0xff]
        %v758 = vld [vmem:[%s176 + $0x1010] sm:$0xff]
        %v759 = vld [vmem:[%s176 + $0x1018] sm:$0xff]
        %v760 = vld [vmem:[%s176 + $0x1020] sm:$0xff]
        %v761 = vld [vmem:[%s176 + $0x1028] sm:$0xff]
        %v762 = vld [vmem:[%s176 + $0x1030] sm:$0xff]
        %v763 = vld [vmem:[%s176 + $0x1038] sm:$0xff]
        %v764 = vld [vmem:[%s176 + $0x1040] sm:$0xff]
        %v765 = vld [vmem:[%s176 + $0x1048] sm:$0xff]
        %v766 = vld [vmem:[%s176 + $0x1050] sm:$0xff]
        %v767 = vld [vmem:[%s176 + $0x1058] sm:$0xff]
        %v768 = vld [vmem:[%s176 + $0x1060] sm:$0xff]
        %v769 = vld [vmem:[%s176 + $0x1068] sm:$0xff]
        %v770 = vld [vmem:[%s176 + $0x1070] sm:$0xff]
        %v771 = vld [vmem:[%s176 + $0x1078] sm:$0xff]
        %v772 = vld [vmem:[%s176 + $0x1080] sm:$0xff]
        %v773 = vld [vmem:[%s176 + $0x1088] sm:$0xff]
        %v774 = vld [vmem:[%s176 + $0x1090] sm:$0xff]
        %v775 = vld [vmem:[%s176 + $0x1098] sm:$0xff]
        %v776 = vld [vmem:[%s176 + $0x10a0] sm:$0xff]
        %v777 = vld [vmem:[%s176 + $0x10a8] sm:$0xff]
        %v778 = vld [vmem:[%s176 + $0x10b0] sm:$0xff]
        %v779 = vld [vmem:[%s176 + $0x10b8] sm:$0xff]
        %v780 = vld [vmem:[%s176 + $0x10c0] sm:$0xff]
        %v781 = vld [vmem:[%s176 + $0x10c8] sm:$0xff]
        %v782 = vld [vmem:[%s176 + $0x10d0] sm:$0xff]
        %v783 = vld [vmem:[%s176 + $0x10d8] sm:$0xff]
        %v784 = vld [vmem:[%s176 + $0x10e0] sm:$0xff]
        %v785 = vld [vmem:[%s176 + $0x10e8] sm:$0xff]
        %v786 = vld [vmem:[%s176 + $0x10f0] sm:$0xff]
        %v787 = vld [vmem:[%s176 + $0x10f8] sm:$0xff]
        %v788 = vld [vmem:[%s176 + $0x1100] sm:$0xff]
        %v789 = vld [vmem:[%s176 + $0x1108] sm:$0xff]
        %v790 = vld [vmem:[%s176 + $0x1110] sm:$0xff]
        %v791 = vld [vmem:[%s176 + $0x1118] sm:$0xff]
        %v792 = vld [vmem:[%s176 + $0x1120] sm:$0xff]
        %v793 = vld [vmem:[%s176 + $0x1128] sm:$0xff]
        %v794 = vld [vmem:[%s176 + $0x1130] sm:$0xff]
        %v795 = vld [vmem:[%s176 + $0x1138] sm:$0xff]
        %v796 = vld [vmem:[%s176 + $0x1140] sm:$0xff]
        %v797 = vld [vmem:[%s176 + $0x1148] sm:$0xff]
        %v798 = vld [vmem:[%s176 + $0x1150] sm:$0xff]
        %v799 = vld [vmem:[%s176 + $0x1158] sm:$0xff]
        %v800 = vld [vmem:[%s176 + $0x1160] sm:$0xff]
        %v801 = vld [vmem:[%s176 + $0x1168] sm:$0xff]
        %v802 = vld [vmem:[%s176 + $0x1170] sm:$0xff]
        %v803 = vld [vmem:[%s176 + $0x1178] sm:$0xff]
        %v804 = vld [vmem:[%s176 + $0x1180] sm:$0xff]
        %v805 = vld [vmem:[%s176 + $0x1188] sm:$0xff]
        %v806 = vld [vmem:[%s176 + $0x1190] sm:$0xff]
        %v807 = vld [vmem:[%s176 + $0x1198] sm:$0xff]
        %v808 = vld [vmem:[%s176 + $0x11a0] sm:$0xff]
        %v809 = vld [vmem:[%s176 + $0x11a8] sm:$0xff]
        %v810 = vld [vmem:[%s176 + $0x11b0] sm:$0xff]
        %v811 = vld [vmem:[%s176 + $0x11b8] sm:$0xff]
        %v812 = vld [vmem:[%s176 + $0x11c0] sm:$0xff]
        %v813 = vld [vmem:[%s176 + $0x11c8] sm:$0xff]
        %v814 = vld [vmem:[%s176 + $0x11d0] sm:$0xff]
        %v815 = vld [vmem:[%s176 + $0x11d8] sm:$0xff]
        %v816 = vld [vmem:[%s176 + $0x11e0] sm:$0xff]
        %v817 = vld [vmem:[%s176 + $0x11e8] sm:$0xff]
        %v818 = vld [vmem:[%s176 + $0x11f0] sm:$0xff]
        %v819 = vld [vmem:[%s176 + $0x11f8] sm:$0xff]
        %v820 = vld [vmem:[%s176 + $0x1200] sm:$0xff]
        %v821 = vld [vmem:[%s176 + $0x1208] sm:$0xff]
        %v822 = vld [vmem:[%s176 + $0x1210] sm:$0xff]
        %v823 = vld [vmem:[%s176 + $0x1218] sm:$0xff]
        %v824 = vld [vmem:[%s176 + $0x1220] sm:$0xff]
        %v825 = vld [vmem:[%s176 + $0x1228] sm:$0xff]
        %v826 = vld [vmem:[%s176 + $0x1230] sm:$0xff]
        %v827 = vld [vmem:[%s176 + $0x1238] sm:$0xff]
        %v828 = vld [vmem:[%s176 + $0x1240] sm:$0xff]
        %v829 = vld [vmem:[%s176 + $0x1248] sm:$0xff]
        %v830 = vld [vmem:[%s176 + $0x1250] sm:$0xff]
        %v831 = vld [vmem:[%s176 + $0x1258] sm:$0xff]
        %v832 = vld [vmem:[%s176 + $0x1260] sm:$0xff]
        %v833 = vld [vmem:[%s176 + $0x1268] sm:$0xff]
        %v834 = vld [vmem:[%s176 + $0x1270] sm:$0xff]
        %v835 = vld [vmem:[%s176 + $0x1278] sm:$0xff]
        %v836 = vld [vmem:[%s176 + $0x1280] sm:$0xff]
        %v837 = vld [vmem:[%s176 + $0x1288] sm:$0xff]
        %v838 = vld [vmem:[%s176 + $0x1290] sm:$0xff]
        %v839 = vld [vmem:[%s176 + $0x1298] sm:$0xff]
        %v840 = vld [vmem:[%s176 + $0x12a0] sm:$0xff]
        %v841 = vld [vmem:[%s176 + $0x12a8] sm:$0xff]
        %v842 = vld [vmem:[%s176 + $0x12b0] sm:$0xff]
        %v843 = vld [vmem:[%s176 + $0x12b8] sm:$0xff]
        %v844 = vld [vmem:[%s176 + $0x12c0] sm:$0xff]
        %v845 = vld [vmem:[%s176 + $0x12c8] sm:$0xff]
        %v846 = vld [vmem:[%s176 + $0x12d0] sm:$0xff]
        %v847 = vld [vmem:[%s176 + $0x12d8] sm:$0xff]
        %v848 = vld [vmem:[%s176 + $0x12e0] sm:$0xff]
        %v849 = vld [vmem:[%s176 + $0x12e8] sm:$0xff]
        %v850 = vld [vmem:[%s176 + $0x12f0] sm:$0xff]
        %v851 = vld [vmem:[%s176 + $0x12f8] sm:$0xff]
        %v852 = vld [vmem:[%s176 + $0x1300] sm:$0xff]
        %v853 = vld [vmem:[%s176 + $0x1308] sm:$0xff]
        %v854 = vld [vmem:[%s176 + $0x1310] sm:$0xff]
        %v855 = vld [vmem:[%s176 + $0x1318] sm:$0xff]
        %v856 = vld [vmem:[%s176 + $0x1320] sm:$0xff]
        %v857 = vld [vmem:[%s176 + $0x1328] sm:$0xff]
        %v858 = vld [vmem:[%s176 + $0x1330] sm:$0xff]
        %v859 = vld [vmem:[%s176 + $0x1338] sm:$0xff]
        %v860 = vld [vmem:[%s176 + $0x1340] sm:$0xff]
        %v861 = vld [vmem:[%s176 + $0x1348] sm:$0xff]
        %v862 = vld [vmem:[%s176 + $0x1350] sm:$0xff]
        %v863 = vld [vmem:[%s176 + $0x1358] sm:$0xff]
        %v864 = vld [vmem:[%s176 + $0x1360] sm:$0xff]
        %v865 = vld [vmem:[%s176 + $0x1368] sm:$0xff]
        %v866 = vld [vmem:[%s176 + $0x1370] sm:$0xff]
        %v867 = vld [vmem:[%s176 + $0x1378] sm:$0xff]
        %v868 = vld [vmem:[%s176 + $0x1380] sm:$0xff]
        %v869 = vld [vmem:[%s176 + $0x1388] sm:$0xff]
        %v870 = vld [vmem:[%s176 + $0x1390] sm:$0xff]
        %v871 = vld [vmem:[%s176 + $0x1398] sm:$0xff]
        %v872 = vld [vmem:[%s176 + $0x13a0] sm:$0xff]
        %v873 = vld [vmem:[%s176 + $0x13a8] sm:$0xff]
        %v874 = vld [vmem:[%s176 + $0x13b0] sm:$0xff]
        %v875 = vld [vmem:[%s176 + $0x13b8] sm:$0xff]
        %v876 = vld [vmem:[%s176 + $0x13c0] sm:$0xff]
        %v877 = vld [vmem:[%s176 + $0x13c8] sm:$0xff]
        %v878 = vld [vmem:[%s176 + $0x13d0] sm:$0xff]
        %v879 = vld [vmem:[%s176 + $0x13d8] sm:$0xff]
        %v880 = vld [vmem:[%s176 + $0x13e0] sm:$0xff]
        %v881 = vld [vmem:[%s176 + $0x13e8] sm:$0xff]
        %v882 = vld [vmem:[%s176 + $0x13f0] sm:$0xff]
        %v883 = vld [vmem:[%s176 + $0x13f8] sm:$0xff]
        %v884 = vld [vmem:[%s176 + $0x1400] sm:$0xff]
        %v885 = vld [vmem:[%s176 + $0x1408] sm:$0xff]
        %v886 = vld [vmem:[%s176 + $0x1410] sm:$0xff]
        %v887 = vld [vmem:[%s176 + $0x1418] sm:$0xff]
        %v888 = vld [vmem:[%s176 + $0x1420] sm:$0xff]
        %v889 = vld [vmem:[%s176 + $0x1428] sm:$0xff]
        %v890 = vld [vmem:[%s176 + $0x1430] sm:$0xff]
        %v891 = vld [vmem:[%s176 + $0x1438] sm:$0xff]
        %v892 = vld [vmem:[%s176 + $0x1440] sm:$0xff]
        %v893 = vld [vmem:[%s176 + $0x1448] sm:$0xff]
        %v894 = vld [vmem:[%s176 + $0x1450] sm:$0xff]
        %v895 = vld [vmem:[%s176 + $0x1458] sm:$0xff]
        %v896 = vld [vmem:[%s176 + $0x1460] sm:$0xff]
        %v897 = vld [vmem:[%s176 + $0x1468] sm:$0xff]
        %v898 = vld [vmem:[%s176 + $0x1470] sm:$0xff]
        %v899 = vld [vmem:[%s176 + $0x1478] sm:$0xff]
        %v900 = vld [vmem:[%s176 + $0x1480] sm:$0xff]
        %v901 = vld [vmem:[%s176 + $0x1488] sm:$0xff]
        %v902 = vld [vmem:[%s176 + $0x1490] sm:$0xff]
        %v903 = vld [vmem:[%s176 + $0x1498] sm:$0xff]
        %v904 = vld [vmem:[%s176 + $0x14a0] sm:$0xff]
        %v905 = vld [vmem:[%s176 + $0x14a8] sm:$0xff]
        %v906 = vld [vmem:[%s176 + $0x14b0] sm:$0xff]
        %v907 = vld [vmem:[%s176 + $0x14b8] sm:$0xff]
        %v908 = vld [vmem:[%s176 + $0x14c0] sm:$0xff]
        %v909 = vld [vmem:[%s176 + $0x14c8] sm:$0xff]
        %v910 = vld [vmem:[%s176 + $0x14d0] sm:$0xff]
        %v911 = vld [vmem:[%s176 + $0x14d8] sm:$0xff]
        %v912 = vld [vmem:[%s176 + $0x14e0] sm:$0xff]
        %v913 = vld [vmem:[%s176 + $0x14e8] sm:$0xff]
        %v914 = vld [vmem:[%s176 + $0x14f0] sm:$0xff]
        %v915 = vld [vmem:[%s176 + $0x14f8] sm:$0xff]
        %v916 = vld [vmem:[%s176 + $0x1500] sm:$0xff]
        %v917 = vld [vmem:[%s176 + $0x1508] sm:$0xff]
        %v918 = vld [vmem:[%s176 + $0x1510] sm:$0xff]
        %v919 = vld [vmem:[%s176 + $0x1518] sm:$0xff]
        %v920 = vld [vmem:[%s176 + $0x1520] sm:$0xff]
        %v921 = vld [vmem:[%s176 + $0x1528] sm:$0xff]
        %v922 = vld [vmem:[%s176 + $0x1530] sm:$0xff]
        %v923 = vld [vmem:[%s176 + $0x1538] sm:$0xff]
        %v924 = vld [vmem:[%s176 + $0x1540] sm:$0xff]
        %v925 = vld [vmem:[%s176 + $0x1548] sm:$0xff]
        %v926 = vld [vmem:[%s176 + $0x1550] sm:$0xff]
        %v927 = vld [vmem:[%s176 + $0x1558] sm:$0xff]
        %v928 = vld [vmem:[%s176 + $0x1560] sm:$0xff]
        %v929 = vld [vmem:[%s176 + $0x1568] sm:$0xff]
        %v930 = vld [vmem:[%s176 + $0x1570] sm:$0xff]
        %v931 = vld [vmem:[%s176 + $0x1578] sm:$0xff]
        %v932 = vld [vmem:[%s176 + $0x1580] sm:$0xff]
        %v933 = vld [vmem:[%s176 + $0x1588] sm:$0xff]
        %v934 = vld [vmem:[%s176 + $0x1590] sm:$0xff]
        %v935 = vld [vmem:[%s176 + $0x1598] sm:$0xff]
        %v936 = vld [vmem:[%s176 + $0x15a0] sm:$0xff]
        %v937 = vld [vmem:[%s176 + $0x15a8] sm:$0xff]
        %v938 = vld [vmem:[%s176 + $0x15b0] sm:$0xff]
        %v939 = vld [vmem:[%s176 + $0x15b8] sm:$0xff]
        %v940 = vld [vmem:[%s176 + $0x15c0] sm:$0xff]
        %v941 = vld [vmem:[%s176 + $0x15c8] sm:$0xff]
        %v942 = vld [vmem:[%s176 + $0x15d0] sm:$0xff]
        %v943 = vld [vmem:[%s176 + $0x15d8] sm:$0xff]
        %v944 = vld [vmem:[%s176 + $0x15e0] sm:$0xff]
        %v945 = vld [vmem:[%s176 + $0x15e8] sm:$0xff]
        %v946 = vld [vmem:[%s176 + $0x15f0] sm:$0xff]
        %v947 = vld [vmem:[%s176 + $0x15f8] sm:$0xff]
        %v948 = vld [vmem:[%s176 + $0x1600] sm:$0xff]
        %v949 = vld [vmem:[%s176 + $0x1608] sm:$0xff]
        %v950 = vld [vmem:[%s176 + $0x1610] sm:$0xff]
        %v951 = vld [vmem:[%s176 + $0x1618] sm:$0xff]
        %v952 = vld [vmem:[%s176 + $0x1620] sm:$0xff]
        %v953 = vld [vmem:[%s176 + $0x1628] sm:$0xff]
        %v954 = vld [vmem:[%s176 + $0x1630] sm:$0xff]
        %v955 = vld [vmem:[%s176 + $0x1638] sm:$0xff]
        %v956 = vld [vmem:[%s176 + $0x1640] sm:$0xff]
        %v957 = vld [vmem:[%s176 + $0x1648] sm:$0xff]
        %v958 = vld [vmem:[%s176 + $0x1650] sm:$0xff]
        %v959 = vld [vmem:[%s176 + $0x1658] sm:$0xff]
        %v960 = vld [vmem:[%s176 + $0x1660] sm:$0xff]
        %v961 = vld [vmem:[%s176 + $0x1668] sm:$0xff]
        %v962 = vld [vmem:[%s176 + $0x1670] sm:$0xff]
        %v963 = vld [vmem:[%s176 + $0x1678] sm:$0xff]
        %v964 = vld [vmem:[%s176 + $0x1680] sm:$0xff]
        %v965 = vld [vmem:[%s176 + $0x1688] sm:$0xff]
        %v966 = vld [vmem:[%s176 + $0x1690] sm:$0xff]
        %v967 = vld [vmem:[%s176 + $0x1698] sm:$0xff]
        %v968 = vld [vmem:[%s176 + $0x16a0] sm:$0xff]
        %v969 = vld [vmem:[%s176 + $0x16a8] sm:$0xff]
        %v970 = vld [vmem:[%s176 + $0x16b0] sm:$0xff]
        %v971 = vld [vmem:[%s176 + $0x16b8] sm:$0xff]
        %v972 = vld [vmem:[%s176 + $0x16c0] sm:$0xff]
        %v973 = vld [vmem:[%s176 + $0x16c8] sm:$0xff]
        %v974 = vld [vmem:[%s176 + $0x16d0] sm:$0xff]
        %v975 = vld [vmem:[%s176 + $0x16d8] sm:$0xff]
        %v976 = vld [vmem:[%s176 + $0x16e0] sm:$0xff]
        %v977 = vld [vmem:[%s176 + $0x16e8] sm:$0xff]
        %v978 = vld [vmem:[%s176 + $0x16f0] sm:$0xff]
        %v979 = vld [vmem:[%s176 + $0x16f8] sm:$0xff]
        %v980 = vld [vmem:[%s176 + $0x1700] sm:$0xff]
        %v981 = vld [vmem:[%s176 + $0x1708] sm:$0xff]
        %v982 = vld [vmem:[%s176 + $0x1710] sm:$0xff]
        %v983 = vld [vmem:[%s176 + $0x1718] sm:$0xff]
        %v984 = vld [vmem:[%s176 + $0x1720] sm:$0xff]
        %v985 = vld [vmem:[%s176 + $0x1728] sm:$0xff]
        %v986 = vld [vmem:[%s176 + $0x1730] sm:$0xff]
        %v987 = vld [vmem:[%s176 + $0x1738] sm:$0xff]
        %v988 = vld [vmem:[%s176 + $0x1740] sm:$0xff]
        %v989 = vld [vmem:[%s176 + $0x1748] sm:$0xff]
        %v990 = vld [vmem:[%s176 + $0x1750] sm:$0xff]
        %v991 = vld [vmem:[%s176 + $0x1758] sm:$0xff]
        %v992 = vld [vmem:[%s176 + $0x1760] sm:$0xff]
        %v993 = vld [vmem:[%s176 + $0x1768] sm:$0xff]
        %v994 = vld [vmem:[%s176 + $0x1770] sm:$0xff]
        %v995 = vld [vmem:[%s176 + $0x1778] sm:$0xff]
        %v996 = vld [vmem:[%s176 + $0x1780] sm:$0xff]
        %v997 = vld [vmem:[%s176 + $0x1788] sm:$0xff]
        %v998 = vld [vmem:[%s176 + $0x1790] sm:$0xff]
        %v999 = vld [vmem:[%s176 + $0x1798] sm:$0xff]
        %v1000 = vld [vmem:[%s176 + $0x17a0] sm:$0xff]
        %v1001 = vld [vmem:[%s176 + $0x17a8] sm:$0xff]
        %v1002 = vld [vmem:[%s176 + $0x17b0] sm:$0xff]
        %v1003 = vld [vmem:[%s176 + $0x17b8] sm:$0xff]
        %v1004 = vld [vmem:[%s176 + $0x17c0] sm:$0xff]
        %v1005 = vld [vmem:[%s176 + $0x17c8] sm:$0xff]
        %v1006 = vld [vmem:[%s176 + $0x17d0] sm:$0xff]
        %v1007 = vld [vmem:[%s176 + $0x17d8] sm:$0xff]
        %v1008 = vld [vmem:[%s176 + $0x17e0] sm:$0xff]
        %v1009 = vld [vmem:[%s176 + $0x17e8] sm:$0xff]
        %v1010 = vld [vmem:[%s176 + $0x17f0] sm:$0xff]
        %v1011 = vld [vmem:[%s176 + $0x17f8] sm:$0xff]
        %v1012 = vld [vmem:[%s176 + $0x1800] sm:$0xff]
        %v1013 = vld [vmem:[%s176 + $0x1808] sm:$0xff]
        %v1014 = vld [vmem:[%s176 + $0x1810] sm:$0xff]
        %v1015 = vld [vmem:[%s176 + $0x1818] sm:$0xff]
        %v1016 = vld [vmem:[%s176 + $0x1820] sm:$0xff]
        %v1017 = vld [vmem:[%s176 + $0x1828] sm:$0xff]
        %v1018 = vld [vmem:[%s176 + $0x1830] sm:$0xff]
        %v1019 = vld [vmem:[%s176 + $0x1838] sm:$0xff]
        %v1020 = vld [vmem:[%s176 + $0x1840] sm:$0xff]
        %v1021 = vld [vmem:[%s176 + $0x1848] sm:$0xff]
        %v1022 = vld [vmem:[%s176 + $0x1850] sm:$0xff]
        %v1023 = vld [vmem:[%s176 + $0x1858] sm:$0xff]
        %v1024 = vld [vmem:[%s176 + $0x1860] sm:$0xff]
        %v1025 = vld [vmem:[%s176 + $0x1868] sm:$0xff]
        %v1026 = vld [vmem:[%s176 + $0x1870] sm:$0xff]
        %v1027 = vld [vmem:[%s176 + $0x1878] sm:$0xff]
        %v1028 = vld [vmem:[%s176 + $0x1880] sm:$0xff]
        %v1029 = vld [vmem:[%s176 + $0x1888] sm:$0xff]
        %v1030 = vld [vmem:[%s176 + $0x1890] sm:$0xff]
        %v1031 = vld [vmem:[%s176 + $0x1898] sm:$0xff]
        %v1032 = vld [vmem:[%s176 + $0x18a0] sm:$0xff]
        %v1033 = vld [vmem:[%s176 + $0x18a8] sm:$0xff]
        %v1034 = vld [vmem:[%s176 + $0x18b0] sm:$0xff]
        %v1035 = vld [vmem:[%s176 + $0x18b8] sm:$0xff]
        %v1036 = vld [vmem:[%s176 + $0x18c0] sm:$0xff]
        %v1037 = vld [vmem:[%s176 + $0x18c8] sm:$0xff]
        %v1038 = vld [vmem:[%s176 + $0x18d0] sm:$0xff]
        %v1039 = vld [vmem:[%s176 + $0x18d8] sm:$0xff]
        %v1040 = vld [vmem:[%s176 + $0x18e0] sm:$0xff]
        %v1041 = vld [vmem:[%s176 + $0x18e8] sm:$0xff]
        %v1042 = vld [vmem:[%s176 + $0x18f0] sm:$0xff]
        %v1043 = vld [vmem:[%s176 + $0x18f8] sm:$0xff]
        %v1044 = vld [vmem:[%s176 + $0x1900] sm:$0xff]
        %v1045 = vld [vmem:[%s176 + $0x1908] sm:$0xff]
        %v1046 = vld [vmem:[%s176 + $0x1910] sm:$0xff]
        %v1047 = vld [vmem:[%s176 + $0x1918] sm:$0xff]
        %v1048 = vld [vmem:[%s176 + $0x1920] sm:$0xff]
        %v1049 = vld [vmem:[%s176 + $0x1928] sm:$0xff]
        %v1050 = vld [vmem:[%s176 + $0x1930] sm:$0xff]
        %v1051 = vld [vmem:[%s176 + $0x1938] sm:$0xff]
        %v1052 = vld [vmem:[%s176 + $0x1940] sm:$0xff]
        %v1053 = vld [vmem:[%s176 + $0x1948] sm:$0xff]
        %v1054 = vld [vmem:[%s176 + $0x1950] sm:$0xff]
        %v1055 = vld [vmem:[%s176 + $0x1958] sm:$0xff]
        %v1056 = vld [vmem:[%s176 + $0x1960] sm:$0xff]
        %v1057 = vld [vmem:[%s176 + $0x1968] sm:$0xff]
        %v1058 = vld [vmem:[%s176 + $0x1970] sm:$0xff]
        %v1059 = vld [vmem:[%s176 + $0x1978] sm:$0xff]
        %v1060 = vld [vmem:[%s176 + $0x1980] sm:$0xff]
        %v1061 = vld [vmem:[%s176 + $0x1988] sm:$0xff]
        %v1062 = vld [vmem:[%s176 + $0x1990] sm:$0xff]
        %v1063 = vld [vmem:[%s176 + $0x1998] sm:$0xff]
        %v1064 = vld [vmem:[%s176 + $0x19a0] sm:$0xff]
        %v1065 = vld [vmem:[%s176 + $0x19a8] sm:$0xff]
        %v1066 = vld [vmem:[%s176 + $0x19b0] sm:$0xff]
        %v1067 = vld [vmem:[%s176 + $0x19b8] sm:$0xff]
        %v1068 = vld [vmem:[%s176 + $0x19c0] sm:$0xff]
        %v1069 = vld [vmem:[%s176 + $0x19c8] sm:$0xff]
        %v1070 = vld [vmem:[%s176 + $0x19d0] sm:$0xff]
        %v1071 = vld [vmem:[%s176 + $0x19d8] sm:$0xff]
        %v1072 = vld [vmem:[%s176 + $0x19e0] sm:$0xff]
        %v1073 = vld [vmem:[%s176 + $0x19e8] sm:$0xff]
        %v1074 = vld [vmem:[%s176 + $0x19f0] sm:$0xff]
        %v1075 = vld [vmem:[%s176 + $0x19f8] sm:$0xff]
        %v1076 = vld [vmem:[%s176 + $0x1a00] sm:$0xff]
        %v1077 = vld [vmem:[%s176 + $0x1a08] sm:$0xff]
        %v1078 = vld [vmem:[%s176 + $0x1a10] sm:$0xff]
        %v1079 = vld [vmem:[%s176 + $0x1a18] sm:$0xff]
        %v1080 = vld [vmem:[%s176 + $0x1a20] sm:$0xff]
        %v1081 = vld [vmem:[%s176 + $0x1a28] sm:$0xff]
        %v1082 = vld [vmem:[%s176 + $0x1a30] sm:$0xff]
        %v1083 = vld [vmem:[%s176 + $0x1a38] sm:$0xff]
        %v1084 = vld [vmem:[%s176 + $0x1a40] sm:$0xff]
        %v1085 = vld [vmem:[%s176 + $0x1a48] sm:$0xff]
        %v1086 = vld [vmem:[%s176 + $0x1a50] sm:$0xff]
        %v1087 = vld [vmem:[%s176 + $0x1a58] sm:$0xff]
        %v1088 = vld [vmem:[%s176 + $0x1a60] sm:$0xff]
        %v1089 = vld [vmem:[%s176 + $0x1a68] sm:$0xff]
        %v1090 = vld [vmem:[%s176 + $0x1a70] sm:$0xff]
        %v1091 = vld [vmem:[%s176 + $0x1a78] sm:$0xff]
        %v1092 = vld [vmem:[%s176 + $0x1a80] sm:$0xff]
        %v1093 = vld [vmem:[%s176 + $0x1a88] sm:$0xff]
        %v1094 = vld [vmem:[%s176 + $0x1a90] sm:$0xff]
        %v1095 = vld [vmem:[%s176 + $0x1a98] sm:$0xff]
        %v1096 = vld [vmem:[%s176 + $0x1aa0] sm:$0xff]
        %v1097 = vld [vmem:[%s176 + $0x1aa8] sm:$0xff]
        %v1098 = vld [vmem:[%s176 + $0x1ab0] sm:$0xff]
        %v1099 = vld [vmem:[%s176 + $0x1ab8] sm:$0xff]
        %v1100 = vld [vmem:[%s176 + $0x1ac0] sm:$0xff]
        %v1101 = vld [vmem:[%s176 + $0x1ac8] sm:$0xff]
        %v1102 = vld [vmem:[%s176 + $0x1ad0] sm:$0xff]
        %v1103 = vld [vmem:[%s176 + $0x1ad8] sm:$0xff]
        %v1104 = vld [vmem:[%s176 + $0x1ae0] sm:$0xff]
        %v1105 = vld [vmem:[%s176 + $0x1ae8] sm:$0xff]
        %v1106 = vld [vmem:[%s176 + $0x1af0] sm:$0xff]
        %v1107 = vld [vmem:[%s176 + $0x1af8] sm:$0xff]
        %v1108 = vld [vmem:[%s176 + $0x1b00] sm:$0xff]
        %v1109 = vld [vmem:[%s176 + $0x1b08] sm:$0xff]
        %v1110 = vld [vmem:[%s176 + $0x1b10] sm:$0xff]
        %v1111 = vld [vmem:[%s176 + $0x1b18] sm:$0xff]
        %v1112 = vld [vmem:[%s176 + $0x1b20] sm:$0xff]
        %v1113 = vld [vmem:[%s176 + $0x1b28] sm:$0xff]
        %v1114 = vld [vmem:[%s176 + $0x1b30] sm:$0xff]
        %v1115 = vld [vmem:[%s176 + $0x1b38] sm:$0xff]
        %v1116 = vld [vmem:[%s176 + $0x1b40] sm:$0xff]
        %v1117 = vld [vmem:[%s176 + $0x1b48] sm:$0xff]
        %v1118 = vld [vmem:[%s176 + $0x1b50] sm:$0xff]
        %v1119 = vld [vmem:[%s176 + $0x1b58] sm:$0xff]
        %v1120 = vld [vmem:[%s176 + $0x1b60] sm:$0xff]
        %v1121 = vld [vmem:[%s176 + $0x1b68] sm:$0xff]
        %v1122 = vld [vmem:[%s176 + $0x1b70] sm:$0xff]
        %v1123 = vld [vmem:[%s176 + $0x1b78] sm:$0xff]
        %v1124 = vld [vmem:[%s176 + $0x1b80] sm:$0xff]
        %v1125 = vld [vmem:[%s176 + $0x1b88] sm:$0xff]
        %v1126 = vld [vmem:[%s176 + $0x1b90] sm:$0xff]
        %v1127 = vld [vmem:[%s176 + $0x1b98] sm:$0xff]
        %v1128 = vld [vmem:[%s176 + $0x1ba0] sm:$0xff]
        %v1129 = vld [vmem:[%s176 + $0x1ba8] sm:$0xff]
        %v1130 = vld [vmem:[%s176 + $0x1bb0] sm:$0xff]
        %v1131 = vld [vmem:[%s176 + $0x1bb8] sm:$0xff]
        %v1132 = vld [vmem:[%s176 + $0x1bc0] sm:$0xff]
        %v1133 = vld [vmem:[%s176 + $0x1bc8] sm:$0xff]
        %v1134 = vld [vmem:[%s176 + $0x1bd0] sm:$0xff]
        %v1135 = vld [vmem:[%s176 + $0x1bd8] sm:$0xff]
        %v1136 = vld [vmem:[%s176 + $0x1be0] sm:$0xff]
        %v1137 = vld [vmem:[%s176 + $0x1be8] sm:$0xff]
        %v1138 = vld [vmem:[%s176 + $0x1bf0] sm:$0xff]
        %v1139 = vld [vmem:[%s176 + $0x1bf8] sm:$0xff]
        %v1140 = vld [vmem:[%s176 + $0x1c00] sm:$0xff]
        %v1141 = vld [vmem:[%s176 + $0x1c08] sm:$0xff]
        %v1142 = vld [vmem:[%s176 + $0x1c10] sm:$0xff]
        %v1143 = vld [vmem:[%s176 + $0x1c18] sm:$0xff]
        %v1144 = vld [vmem:[%s176 + $0x1c20] sm:$0xff]
        %v1145 = vld [vmem:[%s176 + $0x1c28] sm:$0xff]
        %v1146 = vld [vmem:[%s176 + $0x1c30] sm:$0xff]
        %v1147 = vld [vmem:[%s176 + $0x1c38] sm:$0xff]
        %v1148 = vld [vmem:[%s176 + $0x1c40] sm:$0xff]
        %v1149 = vld [vmem:[%s176 + $0x1c48] sm:$0xff]
        %v1150 = vld [vmem:[%s176 + $0x1c50] sm:$0xff]
        %v1151 = vld [vmem:[%s176 + $0x1c58] sm:$0xff]
        %v1152 = vld [vmem:[%s176 + $0x1c60] sm:$0xff]
        %v1153 = vld [vmem:[%s176 + $0x1c68] sm:$0xff]
        %v1154 = vld [vmem:[%s176 + $0x1c70] sm:$0xff]
        %v1155 = vld [vmem:[%s176 + $0x1c78] sm:$0xff]
        %v1156 = vld [vmem:[%s176 + $0x1c80] sm:$0xff]
        %v1157 = vld [vmem:[%s176 + $0x1c88] sm:$0xff]
        %v1158 = vld [vmem:[%s176 + $0x1c90] sm:$0xff]
        %v1159 = vld [vmem:[%s176 + $0x1c98] sm:$0xff]
        %v1160 = vld [vmem:[%s176 + $0x1ca0] sm:$0xff]
        %v1161 = vld [vmem:[%s176 + $0x1ca8] sm:$0xff]
        %v1162 = vld [vmem:[%s176 + $0x1cb0] sm:$0xff]
        %v1163 = vld [vmem:[%s176 + $0x1cb8] sm:$0xff]
        %v1164 = vld [vmem:[%s176 + $0x1cc0] sm:$0xff]
        %v1165 = vld [vmem:[%s176 + $0x1cc8] sm:$0xff]
        %v1166 = vld [vmem:[%s176 + $0x1cd0] sm:$0xff]
        %v1167 = vld [vmem:[%s176 + $0x1cd8] sm:$0xff]
        %v1168 = vld [vmem:[%s176 + $0x1ce0] sm:$0xff]
        %v1169 = vld [vmem:[%s176 + $0x1ce8] sm:$0xff]
        %v1170 = vld [vmem:[%s176 + $0x1cf0] sm:$0xff]
        %v1171 = vld [vmem:[%s176 + $0x1cf8] sm:$0xff]
        %v1172 = vld [vmem:[%s176 + $0x1d00] sm:$0xff]
        %v1173 = vld [vmem:[%s176 + $0x1d08] sm:$0xff]
        %v1174 = vld [vmem:[%s176 + $0x1d10] sm:$0xff]
        %v1175 = vld [vmem:[%s176 + $0x1d18] sm:$0xff]
        %v1176 = vld [vmem:[%s176 + $0x1d20] sm:$0xff]
        %v1177 = vld [vmem:[%s176 + $0x1d28] sm:$0xff]
        %v1178 = vld [vmem:[%s176 + $0x1d30] sm:$0xff]
        %v1179 = vld [vmem:[%s176 + $0x1d38] sm:$0xff]
        %v1180 = vld [vmem:[%s176 + $0x1d40] sm:$0xff]
        %v1181 = vld [vmem:[%s176 + $0x1d48] sm:$0xff]
        %v1182 = vld [vmem:[%s176 + $0x1d50] sm:$0xff]
        %v1183 = vld [vmem:[%s176 + $0x1d58] sm:$0xff]
        %v1184 = vld [vmem:[%s176 + $0x1d60] sm:$0xff]
        %v1185 = vld [vmem:[%s176 + $0x1d68] sm:$0xff]
        %v1186 = vld [vmem:[%s176 + $0x1d70] sm:$0xff]
        %v1187 = vld [vmem:[%s176 + $0x1d78] sm:$0xff]
        %v1188 = vld [vmem:[%s176 + $0x1d80] sm:$0xff]
        %v1189 = vld [vmem:[%s176 + $0x1d88] sm:$0xff]
        %v1190 = vld [vmem:[%s176 + $0x1d90] sm:$0xff]
        %v1191 = vld [vmem:[%s176 + $0x1d98] sm:$0xff]
        %v1192 = vld [vmem:[%s176 + $0x1da0] sm:$0xff]
        %v1193 = vld [vmem:[%s176 + $0x1da8] sm:$0xff]
        %v1194 = vld [vmem:[%s176 + $0x1db0] sm:$0xff]
        %v1195 = vld [vmem:[%s176 + $0x1db8] sm:$0xff]
        %v1196 = vld [vmem:[%s176 + $0x1dc0] sm:$0xff]
        %v1197 = vld [vmem:[%s176 + $0x1dc8] sm:$0xff]
        %v1198 = vld [vmem:[%s176 + $0x1dd0] sm:$0xff]
        %v1199 = vld [vmem:[%s176 + $0x1dd8] sm:$0xff]
        %v1200 = vld [vmem:[%s176 + $0x1de0] sm:$0xff]
        %v1201 = vld [vmem:[%s176 + $0x1de8] sm:$0xff]
        %v1202 = vld [vmem:[%s176 + $0x1df0] sm:$0xff]
        %v1203 = vld [vmem:[%s176 + $0x1df8] sm:$0xff]
        %v1204 = vld [vmem:[%s176 + $0x1e00] sm:$0xff]
        %v1205 = vld [vmem:[%s176 + $0x1e08] sm:$0xff]
        %v1206 = vld [vmem:[%s176 + $0x1e10] sm:$0xff]
        %v1207 = vld [vmem:[%s176 + $0x1e18] sm:$0xff]
        %v1208 = vld [vmem:[%s176 + $0x1e20] sm:$0xff]
        %v1209 = vld [vmem:[%s176 + $0x1e28] sm:$0xff]
        %v1210 = vld [vmem:[%s176 + $0x1e30] sm:$0xff]
        %v1211 = vld [vmem:[%s176 + $0x1e38] sm:$0xff]
        %v1212 = vld [vmem:[%s176 + $0x1e40] sm:$0xff]
        %v1213 = vld [vmem:[%s176 + $0x1e48] sm:$0xff]
        %v1214 = vld [vmem:[%s176 + $0x1e50] sm:$0xff]
        %v1215 = vld [vmem:[%s176 + $0x1e58] sm:$0xff]
        %v1216 = vld [vmem:[%s176 + $0x1e60] sm:$0xff]
        %v1217 = vld [vmem:[%s176 + $0x1e68] sm:$0xff]
        %v1218 = vld [vmem:[%s176 + $0x1e70] sm:$0xff]
        %v1219 = vld [vmem:[%s176 + $0x1e78] sm:$0xff]
        %v1220 = vld [vmem:[%s176 + $0x1e80] sm:$0xff]
        %v1221 = vld [vmem:[%s176 + $0x1e88] sm:$0xff]
        %v1222 = vld [vmem:[%s176 + $0x1e90] sm:$0xff]
        %v1223 = vld [vmem:[%s176 + $0x1e98] sm:$0xff]
        %v1224 = vld [vmem:[%s176 + $0x1ea0] sm:$0xff]
        %v1225 = vld [vmem:[%s176 + $0x1ea8] sm:$0xff]
        %v1226 = vld [vmem:[%s176 + $0x1eb0] sm:$0xff]
        %v1227 = vld [vmem:[%s176 + $0x1eb8] sm:$0xff]
        %v1228 = vld [vmem:[%s176 + $0x1ec0] sm:$0xff]
        %v1229 = vld [vmem:[%s176 + $0x1ec8] sm:$0xff]
        %v1230 = vld [vmem:[%s176 + $0x1ed0] sm:$0xff]
        %v1231 = vld [vmem:[%s176 + $0x1ed8] sm:$0xff]
        %v1232 = vld [vmem:[%s176 + $0x1ee0] sm:$0xff]
        %v1233 = vld [vmem:[%s176 + $0x1ee8] sm:$0xff]
        %v1234 = vld [vmem:[%s176 + $0x1ef0] sm:$0xff]
        %v1235 = vld [vmem:[%s176 + $0x1ef8] sm:$0xff]
        %v1236 = vld [vmem:[%s176 + $0x1f00] sm:$0xff]
        %v1237 = vld [vmem:[%s176 + $0x1f08] sm:$0xff]
        %v1238 = vld [vmem:[%s176 + $0x1f10] sm:$0xff]
        %v1239 = vld [vmem:[%s176 + $0x1f18] sm:$0xff]
        %v1240 = vld [vmem:[%s176 + $0x1f20] sm:$0xff]
        %v1241 = vld [vmem:[%s176 + $0x1f28] sm:$0xff]
        %v1242 = vld [vmem:[%s176 + $0x1f30] sm:$0xff]
        %v1243 = vld [vmem:[%s176 + $0x1f38] sm:$0xff]
        %v1244 = vld [vmem:[%s176 + $0x1f40] sm:$0xff]
        %v1245 = vld [vmem:[%s176 + $0x1f48] sm:$0xff]
        %v1246 = vld [vmem:[%s176 + $0x1f50] sm:$0xff]
        %v1247 = vld [vmem:[%s176 + $0x1f58] sm:$0xff]
        %v1248 = vld [vmem:[%s176 + $0x1f60] sm:$0xff]
        %v1249 = vld [vmem:[%s176 + $0x1f68] sm:$0xff]
        %v1250 = vld [vmem:[%s176 + $0x1f70] sm:$0xff]
        %v1251 = vld [vmem:[%s176 + $0x1f78] sm:$0xff]
        %v1252 = vld [vmem:[%s176 + $0x1f80] sm:$0xff]
        %v1253 = vld [vmem:[%s176 + $0x1f88] sm:$0xff]
        %v1254 = vld [vmem:[%s176 + $0x1f90] sm:$0xff]
        %v1255 = vld [vmem:[%s176 + $0x1f98] sm:$0xff]
        %v1256 = vld [vmem:[%s176 + $0x1fa0] sm:$0xff]
        %v1257 = vld [vmem:[%s176 + $0x1fa8] sm:$0xff]
        %v1258 = vld [vmem:[%s176 + $0x1fb0] sm:$0xff]
        %v1259 = vld [vmem:[%s176 + $0x1fb8] sm:$0xff]
        %v1260 = vld [vmem:[%s176 + $0x1fc0] sm:$0xff]
        %v1261 = vld [vmem:[%s176 + $0x1fc8] sm:$0xff]
        %v1262 = vld [vmem:[%s176 + $0x1fd0] sm:$0xff]
        %v1263 = vld [vmem:[%s176 + $0x1fd8] sm:$0xff]
        %v1264 = vld [vmem:[%s176 + $0x1fe0] sm:$0xff]
        %v1265 = vld [vmem:[%s176 + $0x1fe8] sm:$0xff]
        %v1266 = vld [vmem:[%s176 + $0x1ff0] sm:$0xff]
        %v1267 = vld [vmem:[%s176 + $0x1ff8] sm:$0xff]
        %1284 = vst [vmem:[#allocation1] ss:$4 sm:$0xff] %v228
        %s1285 = scalar_lea.vmem [#allocation1], 32
        %1286 = vst [vmem:[%s1285] ss:$4 sm:$0xff] %v229
        %v1287 = vld.sshfl [vmem:[#allocation1] sm:$0xff pattern:$0x73625140]
        %v1288 = vld.sshfl [vmem:[#allocation1 + $0x8] sm:$0xff pattern:$0x73625140]
        %v1289 = vld.sshfl [vmem:[#allocation1 + $0x10] sm:$0xff pattern:$0x73625140]
        %v1290 = vld.sshfl [vmem:[#allocation1 + $0x18] sm:$0xff pattern:$0x73625140]
        %v1291 = vld.sshfl [vmem:[#allocation1 + $0x20] sm:$0xff pattern:$0x73625140]
        %v1292 = vld.sshfl [vmem:[#allocation1 + $0x28] sm:$0xff pattern:$0x73625140]
        %v1293 = vld.sshfl [vmem:[#allocation1 + $0x30] sm:$0xff pattern:$0x73625140]
        %v1294 = vld.sshfl [vmem:[#allocation1 + $0x38] sm:$0xff pattern:$0x73625140]
        %1295 = vst [vmem:[#allocation1] ss:$4 sm:$0xff] %v230
        %1296 = vst [vmem:[%s1285] ss:$4 sm:$0xff] %v231
        %v1297 = vld.sshfl [vmem:[#allocation1] sm:$0xff pattern:$0x73625140]
        %v1298 = vld.sshfl [vmem:[#allocation1 + $0x8] sm:$0xff pattern:$0x73625140]
        %v1299 = vld.sshfl [vmem:[#allocation1 + $0x10] sm:$0xff pattern:$0x73625140]
        %v1300 = vld.sshfl [vmem:[#allocation1 + $0x18] sm:$0xff pattern:$0x73625140]
        %v1301 = vld.sshfl [vmem:[#allocation1 + $0x20] sm:$0xff pattern:$0x73625140]
        %v1302 = vld.sshfl [vmem:[#allocation1 + $0x28] sm:$0xff pattern:$0x73625140]
        %v1303 = vld.sshfl [vmem:[#allocation1 + $0x30] sm:$0xff pattern:$0x73625140]
        %v1304 = vld.sshfl [vmem:[#allocation1 + $0x38] sm:$0xff pattern:$0x73625140]
        %1305 = vst [vmem:[#allocation1] ss:$4 sm:$0xff] %v232
        %1306 = vst [vmem:[%s1285] ss:$4 sm:$0xff] %v233
        %v1307 = vld.sshfl [vmem:[#allocation1] sm:$0xff pattern:$0x73625140]
        %v1308 = vld.sshfl [vmem:[#allocation1 + $0x8] sm:$0xff pattern:$0x73625140]
        %v1309 = vld.sshfl [vmem:[#allocation1 + $0x10] sm:$0xff pattern:$0x73625140]
        %v1310 = vld.sshfl [vmem:[#allocation1 + $0x18] sm:$0xff pattern:$0x73625140]
        %v1311 = vld.sshfl [vmem:[#allocation1 + $0x20] sm:$0xff pattern:$0x73625140]
        %v1312 = vld.sshfl [vmem:[#allocation1 + $0x28] sm:$0xff pattern:$0x73625140]
        %v1313 = vld.sshfl [vmem:[#allocation1 + $0x30] sm:$0xff pattern:$0x73625140]
        %v1314 = vld.sshfl [vmem:[#allocation1 + $0x38] sm:$0xff pattern:$0x73625140]
        %1315 = vst [vmem:[#allocation1] ss:$4 sm:$0xff] %v234
        %1316 = vst [vmem:[%s1285] ss:$4 sm:$0xff] %v235
        %v1317 = vld.sshfl [vmem:[#allocation1] sm:$0xff pattern:$0x73625140]
        %v1318 = vld.sshfl [vmem:[#allocation1 + $0x8] sm:$0xff pattern:$0x73625140]
        %v1319 = vld.sshfl [vmem:[#allocation1 + $0x10] sm:$0xff pattern:$0x73625140]
        %v1320 = vld.sshfl [vmem:[#allocation1 + $0x18] sm:$0xff pattern:$0x73625140]
        %v1321 = vld.sshfl [vmem:[#allocation1 + $0x20] sm:$0xff pattern:$0x73625140]
        %v1322 = vld.sshfl [vmem:[#allocation1 + $0x28] sm:$0xff pattern:$0x73625140]
        %v1323 = vld.sshfl [vmem:[#allocation1 + $0x30] sm:$0xff pattern:$0x73625140]
        %v1324 = vld.sshfl [vmem:[#allocation1 + $0x38] sm:$0xff pattern:$0x73625140]
        %1325 = vst [vmem:[#allocation1] ss:$4 sm:$0xff] %v236
        %1326 = vst [vmem:[%s1285] ss:$4 sm:$0xff] %v237
        %v1327 = vld.sshfl [vmem:[#allocation1] sm:$0xff pattern:$0x73625140]
        %v1328 = vld.sshfl [vmem:[#allocation1 + $0x8] sm:$0xff pattern:$0x73625140]
        %v1329 = vld.sshfl [vmem:[#allocation1 + $0x10] sm:$0xff pattern:$0x73625140]
        %v1330 = vld.sshfl [vmem:[#allocation1 + $0x18] sm:$0xff pattern:$0x73625140]
        %v1331 = vld.sshfl [vmem:[#allocation1 + $0x20] sm:$0xff pattern:$0x73625140]
        %v1332 = vld.sshfl [vmem:[#allocation1 + $0x28] sm:$0xff pattern:$0x73625140]
        %v1333 = vld.sshfl [vmem:[#allocation1 + $0x30] sm:$0xff pattern:$0x73625140]
        %v1334 = vld.sshfl [vmem:[#allocation1 + $0x38] sm:$0xff pattern:$0x73625140]
        %1335 = vst [vmem:[#allocation1] ss:$4 sm:$0xff] %v238
        %1336 = vst [vmem:[%s1285] ss:$4 sm:$0xff] %v239
        %v1337 = vld.sshfl [vmem:[#allocation1] sm:$0xff pattern:$0x73625140]
        %v1338 = vld.sshfl [vmem:[#allocation1 + $0x8] sm:$0xff pattern:$0x73625140]
        %v1339 = vld.sshfl [vmem:[#allocation1 + $0x10] sm:$0xff pattern:$0x73625140]
        %v1340 = vld.sshfl [vmem:[#allocation1 + $0x18] sm:$0xff pattern:$0x73625140]
        %v1341 = vld.sshfl [vmem:[#allocation1 + $0x20] sm:$0xff pattern:$0x73625140]
        %v1342 = vld.sshfl [vmem:[#allocation1 + $0x28] sm:$0xff pattern:$0x73625140]
        %v1343 = vld.sshfl [vmem:[#allocation1 + $0x30] sm:$0xff pattern:$0x73625140]
        %v1344 = vld.sshfl [vmem:[#allocation1 + $0x38] sm:$0xff pattern:$0x73625140]
        %1345 = vst [vmem:[#allocation1] ss:$4 sm:$0xff] %v240
        %1346 = vst [vmem:[%s1285] ss:$4 sm:$0xff] %v241
        %v1347 = vld.sshfl [vmem:[#allocation1] sm:$0xff pattern:$0x73625140]
        %v1348 = vld.sshfl [vmem:[#allocation1 + $0x8] sm:$0xff pattern:$0x73625140]
        %v1349 = vld.sshfl [vmem:[#allocation1 + $0x10] sm:$0xff pattern:$0x73625140]
        %v1350 = vld.sshfl [vmem:[#allocation1 + $0x18] sm:$0xff pattern:$0x73625140]
        %v1351 = vld.sshfl [vmem:[#allocation1 + $0x20] sm:$0xff pattern:$0x73625140]
        %v1352 = vld.sshfl [vmem:[#allocation1 + $0x28] sm:$0xff pattern:$0x73625140]
        %v1353 = vld.sshfl [vmem:[#allocation1 + $0x30] sm:$0xff pattern:$0x73625140]
        %v1354 = vld.sshfl [vmem:[#allocation1 + $0x38] sm:$0xff pattern:$0x73625140]
        %1355 = vst [vmem:[#allocation1] ss:$4 sm:$0xff] %v242
        %1356 = vst [vmem:[%s1285] ss:$4 sm:$0xff] %v243
        %v1357 = vld.sshfl [vmem:[#allocation1] sm:$0xff pattern:$0x73625140]
        %v1358 = vld.sshfl [vmem:[#allocation1 + $0x8] sm:$0xff pattern:$0x73625140]
        %v1359 = vld.sshfl [vmem:[#allocation1 + $0x10] sm:$0xff pattern:$0x73625140]
        %v1360 = vld.sshfl [vmem:[#allocation1 + $0x18] sm:$0xff pattern:$0x73625140]
        %v1361 = vld.sshfl [vmem:[#allocation1 + $0x20] sm:$0xff pattern:$0x73625140]
        %v1362 = vld.sshfl [vmem:[#allocation1 + $0x28] sm:$0xff pattern:$0x73625140]
        %v1363 = vld.sshfl [vmem:[#allocation1 + $0x30] sm:$0xff pattern:$0x73625140]
        %v1364 = vld.sshfl [vmem:[#allocation1 + $0x38] sm:$0xff pattern:$0x73625140]
        %1429 = vmatpush.msra.mxu0 %v259
        %1430 = vmatpush.msra.mxu0 %v258
        %1431 = vmatpush.msra.mxu0 %v257
        %1432 = vmatpush.msra.mxu0 %v256
        %1433 = vmatpush.msra.mxu0 %v255
        %1434 = vmatpush.msra.mxu0 %v254
        %1435 = vmatpush.msra.mxu0 %v253
        %1436 = vmatpush.msra.mxu0 %v252
        %1437 = vmatpush.msra.mxu0 %v251
        %1438 = vmatpush.msra.mxu0 %v250
        %1439 = vmatpush.msra.mxu0 %v249
        %1440 = vmatpush.msra.mxu0 %v248
        %1441 = vmatpush.msra.mxu0 %v247
        %1442 = vmatpush.msra.mxu0 %v246
        %1443 = vmatpush.msra.mxu0 %v245
        %1444 = vmatpush.msra.mxu0 %v244
        %1445 = vmatmul.f32.gmra.mxu0 %v1287
        %v1446 = vpop.f32.mrf.mxu0
        %v1447 = vadd.f32 0.0, %v1446
        %1448 = vdwg.mxu0
        %1449 = vmatpush.msra.mxu0 %v275
        %1450 = vmatpush.msra.mxu0 %v274
        %1451 = vmatpush.msra.mxu0 %v273
        %1452 = vmatpush.msra.mxu0 %v272
        %1453 = vmatpush.msra.mxu0 %v271
        %1454 = vmatpush.msra.mxu0 %v270
        %1455 = vmatpush.msra.mxu0 %v269
        %1456 = vmatpush.msra.mxu0 %v268
        %1457 = vmatpush.msra.mxu0 %v267
        %1458 = vmatpush.msra.mxu0 %v266
        %1459 = vmatpush.msra.mxu0 %v265
        %1460 = vmatpush.msra.mxu0 %v264
        %1461 = vmatpush.msra.mxu0 %v263
        %1462 = vmatpush.msra.mxu0 %v262
        %1463 = vmatpush.msra.mxu0 %v261
        %1464 = vmatpush.msra.mxu0 %v260
        %1465 = vmatmul.f32.gmra.mxu0 %v1288
        %v1466 = vpop.f32.mrf.mxu0
        %v1467 = vadd.f32 %v1447, %v1466
        %1468 = vdwg.mxu0
        %1469 = vmatpush.msra.mxu0 %v291
        %1470 = vmatpush.msra.mxu0 %v290
        %1471 = vmatpush.msra.mxu0 %v289
        %1472 = vmatpush.msra.mxu0 %v288
        %1473 = vmatpush.msra.mxu0 %v287
        %1474 = vmatpush.msra.mxu0 %v286
        %1475 = vmatpush.msra.mxu0 %v285
        %1476 = vmatpush.msra.mxu0 %v284
        %1477 = vmatpush.msra.mxu0 %v283
        %1478 = vmatpush.msra.mxu0 %v282
        %1479 = vmatpush.msra.mxu0 %v281
        %1480 = vmatpush.msra.mxu0 %v280
        %1481 = vmatpush.msra.mxu0 %v279
        %1482 = vmatpush.msra.mxu0 %v278
        %1483 = vmatpush.msra.mxu0 %v277
        %1484 = vmatpush.msra.mxu0 %v276
        %1485 = vmatmul.f32.gmra.mxu0 %v1289
        %v1486 = vpop.f32.mrf.mxu0
        %v1487 = vadd.f32 %v1467, %v1486
        %1488 = vdwg.mxu0
        %1489 = vmatpush.msra.mxu0 %v307
        %1490 = vmatpush.msra.mxu0 %v306
        %1491 = vmatpush.msra.mxu0 %v305
        %1492 = vmatpush.msra.mxu0 %v304
        %1493 = vmatpush.msra.mxu0 %v303
        %1494 = vmatpush.msra.mxu0 %v302
        %1495 = vmatpush.msra.mxu0 %v301
        %1496 = vmatpush.msra.mxu0 %v300
        %1497 = vmatpush.msra.mxu0 %v299
        %1498 = vmatpush.msra.mxu0 %v298
        %1499 = vmatpush.msra.mxu0 %v297
        %1500 = vmatpush.msra.mxu0 %v296
        %1501 = vmatpush.msra.mxu0 %v295
        %1502 = vmatpush.msra.mxu0 %v294
        %1503 = vmatpush.msra.mxu0 %v293
        %1504 = vmatpush.msra.mxu0 %v292
        %1505 = vmatmul.f32.gmra.mxu0 %v1290
        %v1506 = vpop.f32.mrf.mxu0
        %v1507 = vadd.f32 %v1487, %v1506
        %1508 = vdwg.mxu0
        %1509 = vmatpush.msra.mxu0 %v323
        %1510 = vmatpush.msra.mxu0 %v322
        %1511 = vmatpush.msra.mxu0 %v321
        %1512 = vmatpush.msra.mxu0 %v320
        %1513 = vmatpush.msra.mxu0 %v319
        %1514 = vmatpush.msra.mxu0 %v318
        %1515 = vmatpush.msra.mxu0 %v317
        %1516 = vmatpush.msra.mxu0 %v316
        %1517 = vmatpush.msra.mxu0 %v315
        %1518 = vmatpush.msra.mxu0 %v314
        %1519 = vmatpush.msra.mxu0 %v313
        %1520 = vmatpush.msra.mxu0 %v312
        %1521 = vmatpush.msra.mxu0 %v311
        %1522 = vmatpush.msra.mxu0 %v310
        %1523 = vmatpush.msra.mxu0 %v309
        %1524 = vmatpush.msra.mxu0 %v308
        %1525 = vmatmul.f32.gmra.mxu0 %v1291
        %v1526 = vpop.f32.mrf.mxu0
        %v1527 = vadd.f32 %v1507, %v1526
        %1528 = vdwg.mxu0
        %1529 = vmatpush.msra.mxu0 %v339
        %1530 = vmatpush.msra.mxu0 %v338
        %1531 = vmatpush.msra.mxu0 %v337
        %1532 = vmatpush.msra.mxu0 %v336
        %1533 = vmatpush.msra.mxu0 %v335
        %1534 = vmatpush.msra.mxu0 %v334
        %1535 = vmatpush.msra.mxu0 %v333
        %1536 = vmatpush.msra.mxu0 %v332
        %1537 = vmatpush.msra.mxu0 %v331
        %1538 = vmatpush.msra.mxu0 %v330
        %1539 = vmatpush.msra.mxu0 %v329
        %1540 = vmatpush.msra.mxu0 %v328
        %1541 = vmatpush.msra.mxu0 %v327
        %1542 = vmatpush.msra.mxu0 %v326
        %1543 = vmatpush.msra.mxu0 %v325
        %1544 = vmatpush.msra.mxu0 %v324
        %1545 = vmatmul.f32.gmra.mxu0 %v1292
        %v1546 = vpop.f32.mrf.mxu0
        %v1547 = vadd.f32 %v1527, %v1546
        %1548 = vdwg.mxu0
        %1549 = vmatpush.msra.mxu0 %v355
        %1550 = vmatpush.msra.mxu0 %v354
        %1551 = vmatpush.msra.mxu0 %v353
        %1552 = vmatpush.msra.mxu0 %v352
        %1553 = vmatpush.msra.mxu0 %v351
        %1554 = vmatpush.msra.mxu0 %v350
        %1555 = vmatpush.msra.mxu0 %v349
        %1556 = vmatpush.msra.mxu0 %v348
        %1557 = vmatpush.msra.mxu0 %v347
        %1558 = vmatpush.msra.mxu0 %v346
        %1559 = vmatpush.msra.mxu0 %v345
        %1560 = vmatpush.msra.mxu0 %v344
        %1561 = vmatpush.msra.mxu0 %v343
        %1562 = vmatpush.msra.mxu0 %v342
        %1563 = vmatpush.msra.mxu0 %v341
        %1564 = vmatpush.msra.mxu0 %v340
        %1565 = vmatmul.f32.gmra.mxu0 %v1293
        %v1566 = vpop.f32.mrf.mxu0
        %v1567 = vadd.f32 %v1547, %v1566
        %1568 = vdwg.mxu0
        %1569 = vmatpush.msra.mxu0 %v371
        %1570 = vmatpush.msra.mxu0 %v370
        %1571 = vmatpush.msra.mxu0 %v369
        %1572 = vmatpush.msra.mxu0 %v368
        %1573 = vmatpush.msra.mxu0 %v367
        %1574 = vmatpush.msra.mxu0 %v366
        %1575 = vmatpush.msra.mxu0 %v365
        %1576 = vmatpush.msra.mxu0 %v364
        %1577 = vmatpush.msra.mxu0 %v363
        %1578 = vmatpush.msra.mxu0 %v362
        %1579 = vmatpush.msra.mxu0 %v361
        %1580 = vmatpush.msra.mxu0 %v360
        %1581 = vmatpush.msra.mxu0 %v359
        %1582 = vmatpush.msra.mxu0 %v358
        %1583 = vmatpush.msra.mxu0 %v357
        %1584 = vmatpush.msra.mxu0 %v356
        %1585 = vmatmul.f32.gmra.mxu0 %v1294
        %v1586 = vpop.f32.mrf.mxu0
        %v1587 = vadd.f32 %v1567, %v1586
        %1588 = vdwg.mxu0
        %1589 = vmatpush.msra.mxu0 %v387
        %1590 = vmatpush.msra.mxu0 %v386
        %1591 = vmatpush.msra.mxu0 %v385
        %1592 = vmatpush.msra.mxu0 %v384
        %1593 = vmatpush.msra.mxu0 %v383
        %1594 = vmatpush.msra.mxu0 %v382
        %1595 = vmatpush.msra.mxu0 %v381
        %1596 = vmatpush.msra.mxu0 %v380
        %1597 = vmatpush.msra.mxu0 %v379
        %1598 = vmatpush.msra.mxu0 %v378
        %1599 = vmatpush.msra.mxu0 %v377
        %1600 = vmatpush.msra.mxu0 %v376
        %1601 = vmatpush.msra.mxu0 %v375
        %1602 = vmatpush.msra.mxu0 %v374
        %1603 = vmatpush.msra.mxu0 %v373
        %1604 = vmatpush.msra.mxu0 %v372
        %1605 = vmatmul.f32.gmra.mxu0 %v1297
        %v1606 = vpop.f32.mrf.mxu0
        %v1607 = vadd.f32 %v1587, %v1606
        %1608 = vdwg.mxu0
        %1609 = vmatpush.msra.mxu0 %v403
        %1610 = vmatpush.msra.mxu0 %v402
        %1611 = vmatpush.msra.mxu0 %v401
        %1612 = vmatpush.msra.mxu0 %v400
        %1613 = vmatpush.msra.mxu0 %v399
        %1614 = vmatpush.msra.mxu0 %v398
        %1615 = vmatpush.msra.mxu0 %v397
        %1616 = vmatpush.msra.mxu0 %v396
        %1617 = vmatpush.msra.mxu0 %v395
        %1618 = vmatpush.msra.mxu0 %v394
        %1619 = vmatpush.msra.mxu0 %v393
        %1620 = vmatpush.msra.mxu0 %v392
        %1621 = vmatpush.msra.mxu0 %v391
        %1622 = vmatpush.msra.mxu0 %v390
        %1623 = vmatpush.msra.mxu0 %v389
        %1624 = vmatpush.msra.mxu0 %v388
        %1625 = vmatmul.f32.gmra.mxu0 %v1298
        %v1626 = vpop.f32.mrf.mxu0
        %v1627 = vadd.f32 %v1607, %v1626
        %1628 = vdwg.mxu0
        %1629 = vmatpush.msra.mxu0 %v419
        %1630 = vmatpush.msra.mxu0 %v418
        %1631 = vmatpush.msra.mxu0 %v417
        %1632 = vmatpush.msra.mxu0 %v416
        %1633 = vmatpush.msra.mxu0 %v415
        %1634 = vmatpush.msra.mxu0 %v414
        %1635 = vmatpush.msra.mxu0 %v413
        %1636 = vmatpush.msra.mxu0 %v412
        %1637 = vmatpush.msra.mxu0 %v411
        %1638 = vmatpush.msra.mxu0 %v410
        %1639 = vmatpush.msra.mxu0 %v409
        %1640 = vmatpush.msra.mxu0 %v408
        %1641 = vmatpush.msra.mxu0 %v407
        %1642 = vmatpush.msra.mxu0 %v406
        %1643 = vmatpush.msra.mxu0 %v405
        %1644 = vmatpush.msra.mxu0 %v404
        %1645 = vmatmul.f32.gmra.mxu0 %v1299
        %v1646 = vpop.f32.mrf.mxu0
        %v1647 = vadd.f32 %v1627, %v1646
        %1648 = vdwg.mxu0
        %1649 = vmatpush.msra.mxu0 %v435
        %1650 = vmatpush.msra.mxu0 %v434
        %1651 = vmatpush.msra.mxu0 %v433
        %1652 = vmatpush.msra.mxu0 %v432
        %1653 = vmatpush.msra.mxu0 %v431
        %1654 = vmatpush.msra.mxu0 %v430
        %1655 = vmatpush.msra.mxu0 %v429
        %1656 = vmatpush.msra.mxu0 %v428
        %1657 = vmatpush.msra.mxu0 %v427
        %1658 = vmatpush.msra.mxu0 %v426
        %1659 = vmatpush.msra.mxu0 %v425
        %1660 = vmatpush.msra.mxu0 %v424
        %1661 = vmatpush.msra.mxu0 %v423
        %1662 = vmatpush.msra.mxu0 %v422
        %1663 = vmatpush.msra.mxu0 %v421
        %1664 = vmatpush.msra.mxu0 %v420
        %1665 = vmatmul.f32.gmra.mxu0 %v1300
        %v1666 = vpop.f32.mrf.mxu0
        %v1667 = vadd.f32 %v1647, %v1666
        %1668 = vdwg.mxu0
        %1669 = vmatpush.msra.mxu0 %v451
        %1670 = vmatpush.msra.mxu0 %v450
        %1671 = vmatpush.msra.mxu0 %v449
        %1672 = vmatpush.msra.mxu0 %v448
        %1673 = vmatpush.msra.mxu0 %v447
        %1674 = vmatpush.msra.mxu0 %v446
        %1675 = vmatpush.msra.mxu0 %v445
        %1676 = vmatpush.msra.mxu0 %v444
        %1677 = vmatpush.msra.mxu0 %v443
        %1678 = vmatpush.msra.mxu0 %v442
        %1679 = vmatpush.msra.mxu0 %v441
        %1680 = vmatpush.msra.mxu0 %v440
        %1681 = vmatpush.msra.mxu0 %v439
        %1682 = vmatpush.msra.mxu0 %v438
        %1683 = vmatpush.msra.mxu0 %v437
        %1684 = vmatpush.msra.mxu0 %v436
        %1685 = vmatmul.f32.gmra.mxu0 %v1301
        %v1686 = vpop.f32.mrf.mxu0
        %v1687 = vadd.f32 %v1667, %v1686
        %1688 = vdwg.mxu0
        %1689 = vmatpush.msra.mxu0 %v467
        %1690 = vmatpush.msra.mxu0 %v466
        %1691 = vmatpush.msra.mxu0 %v465
        %1692 = vmatpush.msra.mxu0 %v464
        %1693 = vmatpush.msra.mxu0 %v463
        %1694 = vmatpush.msra.mxu0 %v462
        %1695 = vmatpush.msra.mxu0 %v461
        %1696 = vmatpush.msra.mxu0 %v460
        %1697 = vmatpush.msra.mxu0 %v459
        %1698 = vmatpush.msra.mxu0 %v458
        %1699 = vmatpush.msra.mxu0 %v457
        %1700 = vmatpush.msra.mxu0 %v456
        %1701 = vmatpush.msra.mxu0 %v455
        %1702 = vmatpush.msra.mxu0 %v454
        %1703 = vmatpush.msra.mxu0 %v453
        %1704 = vmatpush.msra.mxu0 %v452
        %1705 = vmatmul.f32.gmra.mxu0 %v1302
        %v1706 = vpop.f32.mrf.mxu0
        %v1707 = vadd.f32 %v1687, %v1706
        %1708 = vdwg.mxu0
        %1709 = vmatpush.msra.mxu0 %v483
        %1710 = vmatpush.msra.mxu0 %v482
        %1711 = vmatpush.msra.mxu0 %v481
        %1712 = vmatpush.msra.mxu0 %v480
        %1713 = vmatpush.msra.mxu0 %v479
        %1714 = vmatpush.msra.mxu0 %v478
        %1715 = vmatpush.msra.mxu0 %v477
        %1716 = vmatpush.msra.mxu0 %v476
        %1717 = vmatpush.msra.mxu0 %v475
        %1718 = vmatpush.msra.mxu0 %v474
        %1719 = vmatpush.msra.mxu0 %v473
        %1720 = vmatpush.msra.mxu0 %v472
        %1721 = vmatpush.msra.mxu0 %v471
        %1722 = vmatpush.msra.mxu0 %v470
        %1723 = vmatpush.msra.mxu0 %v469
        %1724 = vmatpush.msra.mxu0 %v468
        %1725 = vmatmul.f32.gmra.mxu0 %v1303
        %v1726 = vpop.f32.mrf.mxu0
        %v1727 = vadd.f32 %v1707, %v1726
        %1728 = vdwg.mxu0
        %1729 = vmatpush.msra.mxu0 %v499
        %1730 = vmatpush.msra.mxu0 %v498
        %1731 = vmatpush.msra.mxu0 %v497
        %1732 = vmatpush.msra.mxu0 %v496
        %1733 = vmatpush.msra.mxu0 %v495
        %1734 = vmatpush.msra.mxu0 %v494
        %1735 = vmatpush.msra.mxu0 %v493
        %1736 = vmatpush.msra.mxu0 %v492
        %1737 = vmatpush.msra.mxu0 %v491
        %1738 = vmatpush.msra.mxu0 %v490
        %1739 = vmatpush.msra.mxu0 %v489
        %1740 = vmatpush.msra.mxu0 %v488
        %1741 = vmatpush.msra.mxu0 %v487
        %1742 = vmatpush.msra.mxu0 %v486
        %1743 = vmatpush.msra.mxu0 %v485
        %1744 = vmatpush.msra.mxu0 %v484
        %1745 = vmatmul.f32.gmra.mxu0 %v1304
        %v1746 = vpop.f32.mrf.mxu0
        %v1747 = vadd.f32 %v1727, %v1746
        %1748 = vdwg.mxu0
        %1749 = vmatpush.msra.mxu0 %v515
        %1750 = vmatpush.msra.mxu0 %v514
        %1751 = vmatpush.msra.mxu0 %v513
        %1752 = vmatpush.msra.mxu0 %v512
        %1753 = vmatpush.msra.mxu0 %v511
        %1754 = vmatpush.msra.mxu0 %v510
        %1755 = vmatpush.msra.mxu0 %v509
        %1756 = vmatpush.msra.mxu0 %v508
        %1757 = vmatpush.msra.mxu0 %v507
        %1758 = vmatpush.msra.mxu0 %v506
        %1759 = vmatpush.msra.mxu0 %v505
        %1760 = vmatpush.msra.mxu0 %v504
        %1761 = vmatpush.msra.mxu0 %v503
        %1762 = vmatpush.msra.mxu0 %v502
        %1763 = vmatpush.msra.mxu0 %v501
        %1764 = vmatpush.msra.mxu0 %v500
        %1765 = vmatmul.f32.gmra.mxu0 %v1307
        %v1766 = vpop.f32.mrf.mxu0
        %v1767 = vadd.f32 %v1747, %v1766
        %1768 = vdwg.mxu0
        %1769 = vmatpush.msra.mxu0 %v531
        %1770 = vmatpush.msra.mxu0 %v530
        %1771 = vmatpush.msra.mxu0 %v529
        %1772 = vmatpush.msra.mxu0 %v528
        %1773 = vmatpush.msra.mxu0 %v527
        %1774 = vmatpush.msra.mxu0 %v526
        %1775 = vmatpush.msra.mxu0 %v525
        %1776 = vmatpush.msra.mxu0 %v524
        %1777 = vmatpush.msra.mxu0 %v523
        %1778 = vmatpush.msra.mxu0 %v522
        %1779 = vmatpush.msra.mxu0 %v521
        %1780 = vmatpush.msra.mxu0 %v520
        %1781 = vmatpush.msra.mxu0 %v519
        %1782 = vmatpush.msra.mxu0 %v518
        %1783 = vmatpush.msra.mxu0 %v517
        %1784 = vmatpush.msra.mxu0 %v516
        %1785 = vmatmul.f32.gmra.mxu0 %v1308
        %v1786 = vpop.f32.mrf.mxu0
        %v1787 = vadd.f32 %v1767, %v1786
        %1788 = vdwg.mxu0
        %1789 = vmatpush.msra.mxu0 %v547
        %1790 = vmatpush.msra.mxu0 %v546
        %1791 = vmatpush.msra.mxu0 %v545
        %1792 = vmatpush.msra.mxu0 %v544
        %1793 = vmatpush.msra.mxu0 %v543
        %1794 = vmatpush.msra.mxu0 %v542
        %1795 = vmatpush.msra.mxu0 %v541
        %1796 = vmatpush.msra.mxu0 %v540
        %1797 = vmatpush.msra.mxu0 %v539
        %1798 = vmatpush.msra.mxu0 %v538
        %1799 = vmatpush.msra.mxu0 %v537
        %1800 = vmatpush.msra.mxu0 %v536
        %1801 = vmatpush.msra.mxu0 %v535
        %1802 = vmatpush.msra.mxu0 %v534
        %1803 = vmatpush.msra.mxu0 %v533
        %1804 = vmatpush.msra.mxu0 %v532
        %1805 = vmatmul.f32.gmra.mxu0 %v1309
        %v1806 = vpop.f32.mrf.mxu0
        %v1807 = vadd.f32 %v1787, %v1806
        %1808 = vdwg.mxu0
        %1809 = vmatpush.msra.mxu0 %v563
        %1810 = vmatpush.msra.mxu0 %v562
        %1811 = vmatpush.msra.mxu0 %v561
        %1812 = vmatpush.msra.mxu0 %v560
        %1813 = vmatpush.msra.mxu0 %v559
        %1814 = vmatpush.msra.mxu0 %v558
        %1815 = vmatpush.msra.mxu0 %v557
        %1816 = vmatpush.msra.mxu0 %v556
        %1817 = vmatpush.msra.mxu0 %v555
        %1818 = vmatpush.msra.mxu0 %v554
        %1819 = vmatpush.msra.mxu0 %v553
        %1820 = vmatpush.msra.mxu0 %v552
        %1821 = vmatpush.msra.mxu0 %v551
        %1822 = vmatpush.msra.mxu0 %v550
        %1823 = vmatpush.msra.mxu0 %v549
        %1824 = vmatpush.msra.mxu0 %v548
        %1825 = vmatmul.f32.gmra.mxu0 %v1310
        %v1826 = vpop.f32.mrf.mxu0
        %v1827 = vadd.f32 %v1807, %v1826
        %1828 = vdwg.mxu0
        %1829 = vmatpush.msra.mxu0 %v579
        %1830 = vmatpush.msra.mxu0 %v578
        %1831 = vmatpush.msra.mxu0 %v577
        %1832 = vmatpush.msra.mxu0 %v576
        %1833 = vmatpush.msra.mxu0 %v575
        %1834 = vmatpush.msra.mxu0 %v574
        %1835 = vmatpush.msra.mxu0 %v573
        %1836 = vmatpush.msra.mxu0 %v572
        %1837 = vmatpush.msra.mxu0 %v571
        %1838 = vmatpush.msra.mxu0 %v570
        %1839 = vmatpush.msra.mxu0 %v569
        %1840 = vmatpush.msra.mxu0 %v568
        %1841 = vmatpush.msra.mxu0 %v567
        %1842 = vmatpush.msra.mxu0 %v566
        %1843 = vmatpush.msra.mxu0 %v565
        %1844 = vmatpush.msra.mxu0 %v564
        %1845 = vmatmul.f32.gmra.mxu0 %v1311
        %v1846 = vpop.f32.mrf.mxu0
        %v1847 = vadd.f32 %v1827, %v1846
        %1848 = vdwg.mxu0
        %1849 = vmatpush.msra.mxu0 %v595
        %1850 = vmatpush.msra.mxu0 %v594
        %1851 = vmatpush.msra.mxu0 %v593
        %1852 = vmatpush.msra.mxu0 %v592
        %1853 = vmatpush.msra.mxu0 %v591
        %1854 = vmatpush.msra.mxu0 %v590
        %1855 = vmatpush.msra.mxu0 %v589
        %1856 = vmatpush.msra.mxu0 %v588
        %1857 = vmatpush.msra.mxu0 %v587
        %1858 = vmatpush.msra.mxu0 %v586
        %1859 = vmatpush.msra.mxu0 %v585
        %1860 = vmatpush.msra.mxu0 %v584
        %1861 = vmatpush.msra.mxu0 %v583
        %1862 = vmatpush.msra.mxu0 %v582
        %1863 = vmatpush.msra.mxu0 %v581
        %1864 = vmatpush.msra.mxu0 %v580
        %1865 = vmatmul.f32.gmra.mxu0 %v1312
        %v1866 = vpop.f32.mrf.mxu0
        %v1867 = vadd.f32 %v1847, %v1866
        %1868 = vdwg.mxu0
        %1869 = vmatpush.msra.mxu0 %v611
        %1870 = vmatpush.msra.mxu0 %v610
        %1871 = vmatpush.msra.mxu0 %v609
        %1872 = vmatpush.msra.mxu0 %v608
        %1873 = vmatpush.msra.mxu0 %v607
        %1874 = vmatpush.msra.mxu0 %v606
        %1875 = vmatpush.msra.mxu0 %v605
        %1876 = vmatpush.msra.mxu0 %v604
        %1877 = vmatpush.msra.mxu0 %v603
        %1878 = vmatpush.msra.mxu0 %v602
        %1879 = vmatpush.msra.mxu0 %v601
        %1880 = vmatpush.msra.mxu0 %v600
        %1881 = vmatpush.msra.mxu0 %v599
        %1882 = vmatpush.msra.mxu0 %v598
        %1883 = vmatpush.msra.mxu0 %v597
        %1884 = vmatpush.msra.mxu0 %v596
        %1885 = vmatmul.f32.gmra.mxu0 %v1313
        %v1886 = vpop.f32.mrf.mxu0
        %v1887 = vadd.f32 %v1867, %v1886
        %1888 = vdwg.mxu0
        %1889 = vmatpush.msra.mxu0 %v627
        %1890 = vmatpush.msra.mxu0 %v626
        %1891 = vmatpush.msra.mxu0 %v625
        %1892 = vmatpush.msra.mxu0 %v624
        %1893 = vmatpush.msra.mxu0 %v623
        %1894 = vmatpush.msra.mxu0 %v622
        %1895 = vmatpush.msra.mxu0 %v621
        %1896 = vmatpush.msra.mxu0 %v620
        %1897 = vmatpush.msra.mxu0 %v619
        %1898 = vmatpush.msra.mxu0 %v618
        %1899 = vmatpush.msra.mxu0 %v617
        %1900 = vmatpush.msra.mxu0 %v616
        %1901 = vmatpush.msra.mxu0 %v615
        %1902 = vmatpush.msra.mxu0 %v614
        %1903 = vmatpush.msra.mxu0 %v613
        %1904 = vmatpush.msra.mxu0 %v612
        %1905 = vmatmul.f32.gmra.mxu0 %v1314
        %v1906 = vpop.f32.mrf.mxu0
        %v1907 = vadd.f32 %v1887, %v1906
        %1908 = vdwg.mxu0
        %1909 = vmatpush.msra.mxu0 %v643
        %1910 = vmatpush.msra.mxu0 %v642
        %1911 = vmatpush.msra.mxu0 %v641
        %1912 = vmatpush.msra.mxu0 %v640
        %1913 = vmatpush.msra.mxu0 %v639
        %1914 = vmatpush.msra.mxu0 %v638
        %1915 = vmatpush.msra.mxu0 %v637
        %1916 = vmatpush.msra.mxu0 %v636
        %1917 = vmatpush.msra.mxu0 %v635
        %1918 = vmatpush.msra.mxu0 %v634
        %1919 = vmatpush.msra.mxu0 %v633
        %1920 = vmatpush.msra.mxu0 %v632
        %1921 = vmatpush.msra.mxu0 %v631
        %1922 = vmatpush.msra.mxu0 %v630
        %1923 = vmatpush.msra.mxu0 %v629
        %1924 = vmatpush.msra.mxu0 %v628
        %1925 = vmatmul.f32.gmra.mxu0 %v1317
        %v1926 = vpop.f32.mrf.mxu0
        %v1927 = vadd.f32 %v1907, %v1926
        %1928 = vdwg.mxu0
        %1929 = vmatpush.msra.mxu0 %v659
        %1930 = vmatpush.msra.mxu0 %v658
        %1931 = vmatpush.msra.mxu0 %v657
        %1932 = vmatpush.msra.mxu0 %v656
        %1933 = vmatpush.msra.mxu0 %v655
        %1934 = vmatpush.msra.mxu0 %v654
        %1935 = vmatpush.msra.mxu0 %v653
        %1936 = vmatpush.msra.mxu0 %v652
        %1937 = vmatpush.msra.mxu0 %v651
        %1938 = vmatpush.msra.mxu0 %v650
        %1939 = vmatpush.msra.mxu0 %v649
        %1940 = vmatpush.msra.mxu0 %v648
        %1941 = vmatpush.msra.mxu0 %v647
        %1942 = vmatpush.msra.mxu0 %v646
        %1943 = vmatpush.msra.mxu0 %v645
        %1944 = vmatpush.msra.mxu0 %v644
        %1945 = vmatmul.f32.gmra.mxu0 %v1318
        %v1946 = vpop.f32.mrf.mxu0
        %v1947 = vadd.f32 %v1927, %v1946
        %1948 = vdwg.mxu0
        %1949 = vmatpush.msra.mxu0 %v675
        %1950 = vmatpush.msra.mxu0 %v674
        %1951 = vmatpush.msra.mxu0 %v673
        %1952 = vmatpush.msra.mxu0 %v672
        %1953 = vmatpush.msra.mxu0 %v671
        %1954 = vmatpush.msra.mxu0 %v670
        %1955 = vmatpush.msra.mxu0 %v669
        %1956 = vmatpush.msra.mxu0 %v668
        %1957 = vmatpush.msra.mxu0 %v667
        %1958 = vmatpush.msra.mxu0 %v666
        %1959 = vmatpush.msra.mxu0 %v665
        %1960 = vmatpush.msra.mxu0 %v664
        %1961 = vmatpush.msra.mxu0 %v663
        %1962 = vmatpush.msra.mxu0 %v662
        %1963 = vmatpush.msra.mxu0 %v661
        %1964 = vmatpush.msra.mxu0 %v660
        %1965 = vmatmul.f32.gmra.mxu0 %v1319
        %v1966 = vpop.f32.mrf.mxu0
        %v1967 = vadd.f32 %v1947, %v1966
        %1968 = vdwg.mxu0
        %1969 = vmatpush.msra.mxu0 %v691
        %1970 = vmatpush.msra.mxu0 %v690
        %1971 = vmatpush.msra.mxu0 %v689
        %1972 = vmatpush.msra.mxu0 %v688
        %1973 = vmatpush.msra.mxu0 %v687
        %1974 = vmatpush.msra.mxu0 %v686
        %1975 = vmatpush.msra.mxu0 %v685
        %1976 = vmatpush.msra.mxu0 %v684
        %1977 = vmatpush.msra.mxu0 %v683
        %1978 = vmatpush.msra.mxu0 %v682
        %1979 = vmatpush.msra.mxu0 %v681
        %1980 = vmatpush.msra.mxu0 %v680
        %1981 = vmatpush.msra.mxu0 %v679
        %1982 = vmatpush.msra.mxu0 %v678
        %1983 = vmatpush.msra.mxu0 %v677
        %1984 = vmatpush.msra.mxu0 %v676
        %1985 = vmatmul.f32.gmra.mxu0 %v1320
        %v1986 = vpop.f32.mrf.mxu0
        %v1987 = vadd.f32 %v1967, %v1986
        %1988 = vdwg.mxu0
        %1989 = vmatpush.msra.mxu0 %v707
        %1990 = vmatpush.msra.mxu0 %v706
        %1991 = vmatpush.msra.mxu0 %v705
        %1992 = vmatpush.msra.mxu0 %v704
        %1993 = vmatpush.msra.mxu0 %v703
        %1994 = vmatpush.msra.mxu0 %v702
        %1995 = vmatpush.msra.mxu0 %v701
        %1996 = vmatpush.msra.mxu0 %v700
        %1997 = vmatpush.msra.mxu0 %v699
        %1998 = vmatpush.msra.mxu0 %v698
        %1999 = vmatpush.msra.mxu0 %v697
        %2000 = vmatpush.msra.mxu0 %v696
        %2001 = vmatpush.msra.mxu0 %v695
        %2002 = vmatpush.msra.mxu0 %v694
        %2003 = vmatpush.msra.mxu0 %v693
        %2004 = vmatpush.msra.mxu0 %v692
        %2005 = vmatmul.f32.gmra.mxu0 %v1321
        %v2006 = vpop.f32.mrf.mxu0
        %v2007 = vadd.f32 %v1987, %v2006
        %2008 = vdwg.mxu0
        %2009 = vmatpush.msra.mxu0 %v723
        %2010 = vmatpush.msra.mxu0 %v722
        %2011 = vmatpush.msra.mxu0 %v721
        %2012 = vmatpush.msra.mxu0 %v720
        %2013 = vmatpush.msra.mxu0 %v719
        %2014 = vmatpush.msra.mxu0 %v718
        %2015 = vmatpush.msra.mxu0 %v717
        %2016 = vmatpush.msra.mxu0 %v716
        %2017 = vmatpush.msra.mxu0 %v715
        %2018 = vmatpush.msra.mxu0 %v714
        %2019 = vmatpush.msra.mxu0 %v713
        %2020 = vmatpush.msra.mxu0 %v712
        %2021 = vmatpush.msra.mxu0 %v711
        %2022 = vmatpush.msra.mxu0 %v710
        %2023 = vmatpush.msra.mxu0 %v709
        %2024 = vmatpush.msra.mxu0 %v708
        %2025 = vmatmul.f32.gmra.mxu0 %v1322
        %v2026 = vpop.f32.mrf.mxu0
        %v2027 = vadd.f32 %v2007, %v2026
        %2028 = vdwg.mxu0
        %2029 = vmatpush.msra.mxu0 %v739
        %2030 = vmatpush.msra.mxu0 %v738
        %2031 = vmatpush.msra.mxu0 %v737
        %2032 = vmatpush.msra.mxu0 %v736
        %2033 = vmatpush.msra.mxu0 %v735
        %2034 = vmatpush.msra.mxu0 %v734
        %2035 = vmatpush.msra.mxu0 %v733
        %2036 = vmatpush.msra.mxu0 %v732
        %2037 = vmatpush.msra.mxu0 %v731
        %2038 = vmatpush.msra.mxu0 %v730
        %2039 = vmatpush.msra.mxu0 %v729
        %2040 = vmatpush.msra.mxu0 %v728
        %2041 = vmatpush.msra.mxu0 %v727
        %2042 = vmatpush.msra.mxu0 %v726
        %2043 = vmatpush.msra.mxu0 %v725
        %2044 = vmatpush.msra.mxu0 %v724
        %2045 = vmatmul.f32.gmra.mxu0 %v1323
        %v2046 = vpop.f32.mrf.mxu0
        %v2047 = vadd.f32 %v2027, %v2046
        %2048 = vdwg.mxu0
        %2049 = vmatpush.msra.mxu0 %v755
        %2050 = vmatpush.msra.mxu0 %v754
        %2051 = vmatpush.msra.mxu0 %v753
        %2052 = vmatpush.msra.mxu0 %v752
        %2053 = vmatpush.msra.mxu0 %v751
        %2054 = vmatpush.msra.mxu0 %v750
        %2055 = vmatpush.msra.mxu0 %v749
        %2056 = vmatpush.msra.mxu0 %v748
        %2057 = vmatpush.msra.mxu0 %v747
        %2058 = vmatpush.msra.mxu0 %v746
        %2059 = vmatpush.msra.mxu0 %v745
        %2060 = vmatpush.msra.mxu0 %v744
        %2061 = vmatpush.msra.mxu0 %v743
        %2062 = vmatpush.msra.mxu0 %v742
        %2063 = vmatpush.msra.mxu0 %v741
        %2064 = vmatpush.msra.mxu0 %v740
        %2065 = vmatmul.f32.gmra.mxu0 %v1324
        %v2066 = vpop.f32.mrf.mxu0
        %v2067 = vadd.f32 %v2047, %v2066
        %2068 = vdwg.mxu0
        %2069 = vmatpush.msra.mxu0 %v771
        %2070 = vmatpush.msra.mxu0 %v770
        %2071 = vmatpush.msra.mxu0 %v769
        %2072 = vmatpush.msra.mxu0 %v768
        %2073 = vmatpush.msra.mxu0 %v767
        %2074 = vmatpush.msra.mxu0 %v766
        %2075 = vmatpush.msra.mxu0 %v765
        %2076 = vmatpush.msra.mxu0 %v764
        %2077 = vmatpush.msra.mxu0 %v763
        %2078 = vmatpush.msra.mxu0 %v762
        %2079 = vmatpush.msra.mxu0 %v761
        %2080 = vmatpush.msra.mxu0 %v760
        %2081 = vmatpush.msra.mxu0 %v759
        %2082 = vmatpush.msra.mxu0 %v758
        %2083 = vmatpush.msra.mxu0 %v757
        %2084 = vmatpush.msra.mxu0 %v756
        %2085 = vmatmul.f32.gmra.mxu0 %v1327
        %v2086 = vpop.f32.mrf.mxu0
        %v2087 = vadd.f32 %v2067, %v2086
        %2088 = vdwg.mxu0
        %2089 = vmatpush.msra.mxu0 %v787
        %2090 = vmatpush.msra.mxu0 %v786
        %2091 = vmatpush.msra.mxu0 %v785
        %2092 = vmatpush.msra.mxu0 %v784
        %2093 = vmatpush.msra.mxu0 %v783
        %2094 = vmatpush.msra.mxu0 %v782
        %2095 = vmatpush.msra.mxu0 %v781
        %2096 = vmatpush.msra.mxu0 %v780
        %2097 = vmatpush.msra.mxu0 %v779
        %2098 = vmatpush.msra.mxu0 %v778
        %2099 = vmatpush.msra.mxu0 %v777
        %2100 = vmatpush.msra.mxu0 %v776
        %2101 = vmatpush.msra.mxu0 %v775
        %2102 = vmatpush.msra.mxu0 %v774
        %2103 = vmatpush.msra.mxu0 %v773
        %2104 = vmatpush.msra.mxu0 %v772
        %2105 = vmatmul.f32.gmra.mxu0 %v1328
        %v2106 = vpop.f32.mrf.mxu0
        %v2107 = vadd.f32 %v2087, %v2106
        %2108 = vdwg.mxu0
        %2109 = vmatpush.msra.mxu0 %v803
        %2110 = vmatpush.msra.mxu0 %v802
        %2111 = vmatpush.msra.mxu0 %v801
        %2112 = vmatpush.msra.mxu0 %v800
        %2113 = vmatpush.msra.mxu0 %v799
        %2114 = vmatpush.msra.mxu0 %v798
        %2115 = vmatpush.msra.mxu0 %v797
        %2116 = vmatpush.msra.mxu0 %v796
        %2117 = vmatpush.msra.mxu0 %v795
        %2118 = vmatpush.msra.mxu0 %v794
        %2119 = vmatpush.msra.mxu0 %v793
        %2120 = vmatpush.msra.mxu0 %v792
        %2121 = vmatpush.msra.mxu0 %v791
        %2122 = vmatpush.msra.mxu0 %v790
        %2123 = vmatpush.msra.mxu0 %v789
        %2124 = vmatpush.msra.mxu0 %v788
        %2125 = vmatmul.f32.gmra.mxu0 %v1329
        %v2126 = vpop.f32.mrf.mxu0
        %v2127 = vadd.f32 %v2107, %v2126
        %2128 = vdwg.mxu0
        %2129 = vmatpush.msra.mxu0 %v819
        %2130 = vmatpush.msra.mxu0 %v818
        %2131 = vmatpush.msra.mxu0 %v817
        %2132 = vmatpush.msra.mxu0 %v816
        %2133 = vmatpush.msra.mxu0 %v815
        %2134 = vmatpush.msra.mxu0 %v814
        %2135 = vmatpush.msra.mxu0 %v813
        %2136 = vmatpush.msra.mxu0 %v812
        %2137 = vmatpush.msra.mxu0 %v811
        %2138 = vmatpush.msra.mxu0 %v810
        %2139 = vmatpush.msra.mxu0 %v809
        %2140 = vmatpush.msra.mxu0 %v808
        %2141 = vmatpush.msra.mxu0 %v807
        %2142 = vmatpush.msra.mxu0 %v806
        %2143 = vmatpush.msra.mxu0 %v805
        %2144 = vmatpush.msra.mxu0 %v804
        %2145 = vmatmul.f32.gmra.mxu0 %v1330
        %v2146 = vpop.f32.mrf.mxu0
        %v2147 = vadd.f32 %v2127, %v2146
        %2148 = vdwg.mxu0
        %2149 = vmatpush.msra.mxu0 %v835
        %2150 = vmatpush.msra.mxu0 %v834
        %2151 = vmatpush.msra.mxu0 %v833
        %2152 = vmatpush.msra.mxu0 %v832
        %2153 = vmatpush.msra.mxu0 %v831
        %2154 = vmatpush.msra.mxu0 %v830
        %2155 = vmatpush.msra.mxu0 %v829
        %2156 = vmatpush.msra.mxu0 %v828
        %2157 = vmatpush.msra.mxu0 %v827
        %2158 = vmatpush.msra.mxu0 %v826
        %2159 = vmatpush.msra.mxu0 %v825
        %2160 = vmatpush.msra.mxu0 %v824
        %2161 = vmatpush.msra.mxu0 %v823
        %2162 = vmatpush.msra.mxu0 %v822
        %2163 = vmatpush.msra.mxu0 %v821
        %2164 = vmatpush.msra.mxu0 %v820
        %2165 = vmatmul.f32.gmra.mxu0 %v1331
        %v2166 = vpop.f32.mrf.mxu0
        %v2167 = vadd.f32 %v2147, %v2166
        %2168 = vdwg.mxu0
        %2169 = vmatpush.msra.mxu0 %v851
        %2170 = vmatpush.msra.mxu0 %v850
        %2171 = vmatpush.msra.mxu0 %v849
        %2172 = vmatpush.msra.mxu0 %v848
        %2173 = vmatpush.msra.mxu0 %v847
        %2174 = vmatpush.msra.mxu0 %v846
        %2175 = vmatpush.msra.mxu0 %v845
        %2176 = vmatpush.msra.mxu0 %v844
        %2177 = vmatpush.msra.mxu0 %v843
        %2178 = vmatpush.msra.mxu0 %v842
        %2179 = vmatpush.msra.mxu0 %v841
        %2180 = vmatpush.msra.mxu0 %v840
        %2181 = vmatpush.msra.mxu0 %v839
        %2182 = vmatpush.msra.mxu0 %v838
        %2183 = vmatpush.msra.mxu0 %v837
        %2184 = vmatpush.msra.mxu0 %v836
        %2185 = vmatmul.f32.gmra.mxu0 %v1332
        %v2186 = vpop.f32.mrf.mxu0
        %v2187 = vadd.f32 %v2167, %v2186
        %2188 = vdwg.mxu0
        %2189 = vmatpush.msra.mxu0 %v867
        %2190 = vmatpush.msra.mxu0 %v866
        %2191 = vmatpush.msra.mxu0 %v865
        %2192 = vmatpush.msra.mxu0 %v864
        %2193 = vmatpush.msra.mxu0 %v863
        %2194 = vmatpush.msra.mxu0 %v862
        %2195 = vmatpush.msra.mxu0 %v861
        %2196 = vmatpush.msra.mxu0 %v860
        %2197 = vmatpush.msra.mxu0 %v859
        %2198 = vmatpush.msra.mxu0 %v858
        %2199 = vmatpush.msra.mxu0 %v857
        %2200 = vmatpush.msra.mxu0 %v856
        %2201 = vmatpush.msra.mxu0 %v855
        %2202 = vmatpush.msra.mxu0 %v854
        %2203 = vmatpush.msra.mxu0 %v853
        %2204 = vmatpush.msra.mxu0 %v852
        %2205 = vmatmul.f32.gmra.mxu0 %v1333
        %v2206 = vpop.f32.mrf.mxu0
        %v2207 = vadd.f32 %v2187, %v2206
        %2208 = vdwg.mxu0
        %2209 = vmatpush.msra.mxu0 %v883
        %2210 = vmatpush.msra.mxu0 %v882
        %2211 = vmatpush.msra.mxu0 %v881
        %2212 = vmatpush.msra.mxu0 %v880
        %2213 = vmatpush.msra.mxu0 %v879
        %2214 = vmatpush.msra.mxu0 %v878
        %2215 = vmatpush.msra.mxu0 %v877
        %2216 = vmatpush.msra.mxu0 %v876
        %2217 = vmatpush.msra.mxu0 %v875
        %2218 = vmatpush.msra.mxu0 %v874
        %2219 = vmatpush.msra.mxu0 %v873
        %2220 = vmatpush.msra.mxu0 %v872
        %2221 = vmatpush.msra.mxu0 %v871
        %2222 = vmatpush.msra.mxu0 %v870
        %2223 = vmatpush.msra.mxu0 %v869
        %2224 = vmatpush.msra.mxu0 %v868
        %2225 = vmatmul.f32.gmra.mxu0 %v1334
        %v2226 = vpop.f32.mrf.mxu0
        %v2227 = vadd.f32 %v2207, %v2226
        %2228 = vdwg.mxu0
        %2229 = vmatpush.msra.mxu0 %v899
        %2230 = vmatpush.msra.mxu0 %v898
        %2231 = vmatpush.msra.mxu0 %v897
        %2232 = vmatpush.msra.mxu0 %v896
        %2233 = vmatpush.msra.mxu0 %v895
        %2234 = vmatpush.msra.mxu0 %v894
        %2235 = vmatpush.msra.mxu0 %v893
        %2236 = vmatpush.msra.mxu0 %v892
        %2237 = vmatpush.msra.mxu0 %v891
        %2238 = vmatpush.msra.mxu0 %v890
        %2239 = vmatpush.msra.mxu0 %v889
        %2240 = vmatpush.msra.mxu0 %v888
        %2241 = vmatpush.msra.mxu0 %v887
        %2242 = vmatpush.msra.mxu0 %v886
        %2243 = vmatpush.msra.mxu0 %v885
        %2244 = vmatpush.msra.mxu0 %v884
        %2245 = vmatmul.f32.gmra.mxu0 %v1337
        %v2246 = vpop.f32.mrf.mxu0
        %v2247 = vadd.f32 %v2227, %v2246
        %2248 = vdwg.mxu0
        %2249 = vmatpush.msra.mxu0 %v915
        %2250 = vmatpush.msra.mxu0 %v914
        %2251 = vmatpush.msra.mxu0 %v913
        %2252 = vmatpush.msra.mxu0 %v912
        %2253 = vmatpush.msra.mxu0 %v911
        %2254 = vmatpush.msra.mxu0 %v910
        %2255 = vmatpush.msra.mxu0 %v909
        %2256 = vmatpush.msra.mxu0 %v908
        %2257 = vmatpush.msra.mxu0 %v907
        %2258 = vmatpush.msra.mxu0 %v906
        %2259 = vmatpush.msra.mxu0 %v905
        %2260 = vmatpush.msra.mxu0 %v904
        %2261 = vmatpush.msra.mxu0 %v903
        %2262 = vmatpush.msra.mxu0 %v902
        %2263 = vmatpush.msra.mxu0 %v901
        %2264 = vmatpush.msra.mxu0 %v900
        %2265 = vmatmul.f32.gmra.mxu0 %v1338
        %v2266 = vpop.f32.mrf.mxu0
        %v2267 = vadd.f32 %v2247, %v2266
        %2268 = vdwg.mxu0
        %2269 = vmatpush.msra.mxu0 %v931
        %2270 = vmatpush.msra.mxu0 %v930
        %2271 = vmatpush.msra.mxu0 %v929
        %2272 = vmatpush.msra.mxu0 %v928
        %2273 = vmatpush.msra.mxu0 %v927
        %2274 = vmatpush.msra.mxu0 %v926
        %2275 = vmatpush.msra.mxu0 %v925
        %2276 = vmatpush.msra.mxu0 %v924
        %2277 = vmatpush.msra.mxu0 %v923
        %2278 = vmatpush.msra.mxu0 %v922
        %2279 = vmatpush.msra.mxu0 %v921
        %2280 = vmatpush.msra.mxu0 %v920
        %2281 = vmatpush.msra.mxu0 %v919
        %2282 = vmatpush.msra.mxu0 %v918
        %2283 = vmatpush.msra.mxu0 %v917
        %2284 = vmatpush.msra.mxu0 %v916
        %2285 = vmatmul.f32.gmra.mxu0 %v1339
        %v2286 = vpop.f32.mrf.mxu0
        %v2287 = vadd.f32 %v2267, %v2286
        %2288 = vdwg.mxu0
        %2289 = vmatpush.msra.mxu0 %v947
        %2290 = vmatpush.msra.mxu0 %v946
        %2291 = vmatpush.msra.mxu0 %v945
        %2292 = vmatpush.msra.mxu0 %v944
        %2293 = vmatpush.msra.mxu0 %v943
        %2294 = vmatpush.msra.mxu0 %v942
        %2295 = vmatpush.msra.mxu0 %v941
        %2296 = vmatpush.msra.mxu0 %v940
        %2297 = vmatpush.msra.mxu0 %v939
        %2298 = vmatpush.msra.mxu0 %v938
        %2299 = vmatpush.msra.mxu0 %v937
        %2300 = vmatpush.msra.mxu0 %v936
        %2301 = vmatpush.msra.mxu0 %v935
        %2302 = vmatpush.msra.mxu0 %v934
        %2303 = vmatpush.msra.mxu0 %v933
        %2304 = vmatpush.msra.mxu0 %v932
        %2305 = vmatmul.f32.gmra.mxu0 %v1340
        %v2306 = vpop.f32.mrf.mxu0
        %v2307 = vadd.f32 %v2287, %v2306
        %2308 = vdwg.mxu0
        %2309 = vmatpush.msra.mxu0 %v963
        %2310 = vmatpush.msra.mxu0 %v962
        %2311 = vmatpush.msra.mxu0 %v961
        %2312 = vmatpush.msra.mxu0 %v960
        %2313 = vmatpush.msra.mxu0 %v959
        %2314 = vmatpush.msra.mxu0 %v958
        %2315 = vmatpush.msra.mxu0 %v957
        %2316 = vmatpush.msra.mxu0 %v956
        %2317 = vmatpush.msra.mxu0 %v955
        %2318 = vmatpush.msra.mxu0 %v954
        %2319 = vmatpush.msra.mxu0 %v953
        %2320 = vmatpush.msra.mxu0 %v952
        %2321 = vmatpush.msra.mxu0 %v951
        %2322 = vmatpush.msra.mxu0 %v950
        %2323 = vmatpush.msra.mxu0 %v949
        %2324 = vmatpush.msra.mxu0 %v948
        %2325 = vmatmul.f32.gmra.mxu0 %v1341
        %v2326 = vpop.f32.mrf.mxu0
        %v2327 = vadd.f32 %v2307, %v2326
        %2328 = vdwg.mxu0
        %2329 = vmatpush.msra.mxu0 %v979
        %2330 = vmatpush.msra.mxu0 %v978
        %2331 = vmatpush.msra.mxu0 %v977
        %2332 = vmatpush.msra.mxu0 %v976
        %2333 = vmatpush.msra.mxu0 %v975
        %2334 = vmatpush.msra.mxu0 %v974
        %2335 = vmatpush.msra.mxu0 %v973
        %2336 = vmatpush.msra.mxu0 %v972
        %2337 = vmatpush.msra.mxu0 %v971
        %2338 = vmatpush.msra.mxu0 %v970
        %2339 = vmatpush.msra.mxu0 %v969
        %2340 = vmatpush.msra.mxu0 %v968
        %2341 = vmatpush.msra.mxu0 %v967
        %2342 = vmatpush.msra.mxu0 %v966
        %2343 = vmatpush.msra.mxu0 %v965
        %2344 = vmatpush.msra.mxu0 %v964
        %2345 = vmatmul.f32.gmra.mxu0 %v1342
        %v2346 = vpop.f32.mrf.mxu0
        %v2347 = vadd.f32 %v2327, %v2346
        %2348 = vdwg.mxu0
        %2349 = vmatpush.msra.mxu0 %v995
        %2350 = vmatpush.msra.mxu0 %v994
        %2351 = vmatpush.msra.mxu0 %v993
        %2352 = vmatpush.msra.mxu0 %v992
        %2353 = vmatpush.msra.mxu0 %v991
        %2354 = vmatpush.msra.mxu0 %v990
        %2355 = vmatpush.msra.mxu0 %v989
        %2356 = vmatpush.msra.mxu0 %v988
        %2357 = vmatpush.msra.mxu0 %v987
        %2358 = vmatpush.msra.mxu0 %v986
        %2359 = vmatpush.msra.mxu0 %v985
        %2360 = vmatpush.msra.mxu0 %v984
        %2361 = vmatpush.msra.mxu0 %v983
        %2362 = vmatpush.msra.mxu0 %v982
        %2363 = vmatpush.msra.mxu0 %v981
        %2364 = vmatpush.msra.mxu0 %v980
        %2365 = vmatmul.f32.gmra.mxu0 %v1343
        %v2366 = vpop.f32.mrf.mxu0
        %v2367 = vadd.f32 %v2347, %v2366
        %2368 = vdwg.mxu0
        %2369 = vmatpush.msra.mxu0 %v1011
        %2370 = vmatpush.msra.mxu0 %v1010
        %2371 = vmatpush.msra.mxu0 %v1009
        %2372 = vmatpush.msra.mxu0 %v1008
        %2373 = vmatpush.msra.mxu0 %v1007
        %2374 = vmatpush.msra.mxu0 %v1006
        %2375 = vmatpush.msra.mxu0 %v1005
        %2376 = vmatpush.msra.mxu0 %v1004
        %2377 = vmatpush.msra.mxu0 %v1003
        %2378 = vmatpush.msra.mxu0 %v1002
        %2379 = vmatpush.msra.mxu0 %v1001
        %2380 = vmatpush.msra.mxu0 %v1000
        %2381 = vmatpush.msra.mxu0 %v999
        %2382 = vmatpush.msra.mxu0 %v998
        %2383 = vmatpush.msra.mxu0 %v997
        %2384 = vmatpush.msra.mxu0 %v996
        %2385 = vmatmul.f32.gmra.mxu0 %v1344
        %v2386 = vpop.f32.mrf.mxu0
        %v2387 = vadd.f32 %v2367, %v2386
        %2388 = vdwg.mxu0
        %2389 = vmatpush.msra.mxu0 %v1027
        %2390 = vmatpush.msra.mxu0 %v1026
        %2391 = vmatpush.msra.mxu0 %v1025
        %2392 = vmatpush.msra.mxu0 %v1024
        %2393 = vmatpush.msra.mxu0 %v1023
        %2394 = vmatpush.msra.mxu0 %v1022
        %2395 = vmatpush.msra.mxu0 %v1021
        %2396 = vmatpush.msra.mxu0 %v1020
        %2397 = vmatpush.msra.mxu0 %v1019
        %2398 = vmatpush.msra.mxu0 %v1018
        %2399 = vmatpush.msra.mxu0 %v1017
        %2400 = vmatpush.msra.mxu0 %v1016
        %2401 = vmatpush.msra.mxu0 %v1015
        %2402 = vmatpush.msra.mxu0 %v1014
        %2403 = vmatpush.msra.mxu0 %v1013
        %2404 = vmatpush.msra.mxu0 %v1012
        %2405 = vmatmul.f32.gmra.mxu0 %v1347
        %v2406 = vpop.f32.mrf.mxu0
        %v2407 = vadd.f32 %v2387, %v2406
        %2408 = vdwg.mxu0
        %2409 = vmatpush.msra.mxu0 %v1043
        %2410 = vmatpush.msra.mxu0 %v1042
        %2411 = vmatpush.msra.mxu0 %v1041
        %2412 = vmatpush.msra.mxu0 %v1040
        %2413 = vmatpush.msra.mxu0 %v1039
        %2414 = vmatpush.msra.mxu0 %v1038
        %2415 = vmatpush.msra.mxu0 %v1037
        %2416 = vmatpush.msra.mxu0 %v1036
        %2417 = vmatpush.msra.mxu0 %v1035
        %2418 = vmatpush.msra.mxu0 %v1034
        %2419 = vmatpush.msra.mxu0 %v1033
        %2420 = vmatpush.msra.mxu0 %v1032
        %2421 = vmatpush.msra.mxu0 %v1031
        %2422 = vmatpush.msra.mxu0 %v1030
        %2423 = vmatpush.msra.mxu0 %v1029
        %2424 = vmatpush.msra.mxu0 %v1028
        %2425 = vmatmul.f32.gmra.mxu0 %v1348
        %v2426 = vpop.f32.mrf.mxu0
        %v2427 = vadd.f32 %v2407, %v2426
        %2428 = vdwg.mxu0
        %2429 = vmatpush.msra.mxu0 %v1059
        %2430 = vmatpush.msra.mxu0 %v1058
        %2431 = vmatpush.msra.mxu0 %v1057
        %2432 = vmatpush.msra.mxu0 %v1056
        %2433 = vmatpush.msra.mxu0 %v1055
        %2434 = vmatpush.msra.mxu0 %v1054
        %2435 = vmatpush.msra.mxu0 %v1053
        %2436 = vmatpush.msra.mxu0 %v1052
        %2437 = vmatpush.msra.mxu0 %v1051
        %2438 = vmatpush.msra.mxu0 %v1050
        %2439 = vmatpush.msra.mxu0 %v1049
        %2440 = vmatpush.msra.mxu0 %v1048
        %2441 = vmatpush.msra.mxu0 %v1047
        %2442 = vmatpush.msra.mxu0 %v1046
        %2443 = vmatpush.msra.mxu0 %v1045
        %2444 = vmatpush.msra.mxu0 %v1044
        %2445 = vmatmul.f32.gmra.mxu0 %v1349
        %v2446 = vpop.f32.mrf.mxu0
        %v2447 = vadd.f32 %v2427, %v2446
        %2448 = vdwg.mxu0
        %2449 = vmatpush.msra.mxu0 %v1075
        %2450 = vmatpush.msra.mxu0 %v1074
        %2451 = vmatpush.msra.mxu0 %v1073
        %2452 = vmatpush.msra.mxu0 %v1072
        %2453 = vmatpush.msra.mxu0 %v1071
        %2454 = vmatpush.msra.mxu0 %v1070
        %2455 = vmatpush.msra.mxu0 %v1069
        %2456 = vmatpush.msra.mxu0 %v1068
        %2457 = vmatpush.msra.mxu0 %v1067
        %2458 = vmatpush.msra.mxu0 %v1066
        %2459 = vmatpush.msra.mxu0 %v1065
        %2460 = vmatpush.msra.mxu0 %v1064
        %2461 = vmatpush.msra.mxu0 %v1063
        %2462 = vmatpush.msra.mxu0 %v1062
        %2463 = vmatpush.msra.mxu0 %v1061
        %2464 = vmatpush.msra.mxu0 %v1060
        %2465 = vmatmul.f32.gmra.mxu0 %v1350
        %v2466 = vpop.f32.mrf.mxu0
        %v2467 = vadd.f32 %v2447, %v2466
        %2468 = vdwg.mxu0
        %2469 = vmatpush.msra.mxu0 %v1091
        %2470 = vmatpush.msra.mxu0 %v1090
        %2471 = vmatpush.msra.mxu0 %v1089
        %2472 = vmatpush.msra.mxu0 %v1088
        %2473 = vmatpush.msra.mxu0 %v1087
        %2474 = vmatpush.msra.mxu0 %v1086
        %2475 = vmatpush.msra.mxu0 %v1085
        %2476 = vmatpush.msra.mxu0 %v1084
        %2477 = vmatpush.msra.mxu0 %v1083
        %2478 = vmatpush.msra.mxu0 %v1082
        %2479 = vmatpush.msra.mxu0 %v1081
        %2480 = vmatpush.msra.mxu0 %v1080
        %2481 = vmatpush.msra.mxu0 %v1079
        %2482 = vmatpush.msra.mxu0 %v1078
        %2483 = vmatpush.msra.mxu0 %v1077
        %2484 = vmatpush.msra.mxu0 %v1076
        %2485 = vmatmul.f32.gmra.mxu0 %v1351
        %v2486 = vpop.f32.mrf.mxu0
        %v2487 = vadd.f32 %v2467, %v2486
        %2488 = vdwg.mxu0
        %2489 = vmatpush.msra.mxu0 %v1107
        %2490 = vmatpush.msra.mxu0 %v1106
        %2491 = vmatpush.msra.mxu0 %v1105
        %2492 = vmatpush.msra.mxu0 %v1104
        %2493 = vmatpush.msra.mxu0 %v1103
        %2494 = vmatpush.msra.mxu0 %v1102
        %2495 = vmatpush.msra.mxu0 %v1101
        %2496 = vmatpush.msra.mxu0 %v1100
        %2497 = vmatpush.msra.mxu0 %v1099
        %2498 = vmatpush.msra.mxu0 %v1098
        %2499 = vmatpush.msra.mxu0 %v1097
        %2500 = vmatpush.msra.mxu0 %v1096
        %2501 = vmatpush.msra.mxu0 %v1095
        %2502 = vmatpush.msra.mxu0 %v1094
        %2503 = vmatpush.msra.mxu0 %v1093
        %2504 = vmatpush.msra.mxu0 %v1092
        %2505 = vmatmul.f32.gmra.mxu0 %v1352
        %v2506 = vpop.f32.mrf.mxu0
        %v2507 = vadd.f32 %v2487, %v2506
        %2508 = vdwg.mxu0
        %2509 = vmatpush.msra.mxu0 %v1123
        %2510 = vmatpush.msra.mxu0 %v1122
        %2511 = vmatpush.msra.mxu0 %v1121
        %2512 = vmatpush.msra.mxu0 %v1120
        %2513 = vmatpush.msra.mxu0 %v1119
        %2514 = vmatpush.msra.mxu0 %v1118
        %2515 = vmatpush.msra.mxu0 %v1117
        %2516 = vmatpush.msra.mxu0 %v1116
        %2517 = vmatpush.msra.mxu0 %v1115
        %2518 = vmatpush.msra.mxu0 %v1114
        %2519 = vmatpush.msra.mxu0 %v1113
        %2520 = vmatpush.msra.mxu0 %v1112
        %2521 = vmatpush.msra.mxu0 %v1111
        %2522 = vmatpush.msra.mxu0 %v1110
        %2523 = vmatpush.msra.mxu0 %v1109
        %2524 = vmatpush.msra.mxu0 %v1108
        %2525 = vmatmul.f32.gmra.mxu0 %v1353
        %v2526 = vpop.f32.mrf.mxu0
        %v2527 = vadd.f32 %v2507, %v2526
        %2528 = vdwg.mxu0
        %2529 = vmatpush.msra.mxu0 %v1139
        %2530 = vmatpush.msra.mxu0 %v1138
        %2531 = vmatpush.msra.mxu0 %v1137
        %2532 = vmatpush.msra.mxu0 %v1136
        %2533 = vmatpush.msra.mxu0 %v1135
        %2534 = vmatpush.msra.mxu0 %v1134
        %2535 = vmatpush.msra.mxu0 %v1133
        %2536 = vmatpush.msra.mxu0 %v1132
        %2537 = vmatpush.msra.mxu0 %v1131
        %2538 = vmatpush.msra.mxu0 %v1130
        %2539 = vmatpush.msra.mxu0 %v1129
        %2540 = vmatpush.msra.mxu0 %v1128
        %2541 = vmatpush.msra.mxu0 %v1127
        %2542 = vmatpush.msra.mxu0 %v1126
        %2543 = vmatpush.msra.mxu0 %v1125
        %2544 = vmatpush.msra.mxu0 %v1124
        %2545 = vmatmul.f32.gmra.mxu0 %v1354
        %v2546 = vpop.f32.mrf.mxu0
        %v2547 = vadd.f32 %v2527, %v2546
        %2548 = vdwg.mxu0
        %2549 = vmatpush.msra.mxu0 %v1155
        %2550 = vmatpush.msra.mxu0 %v1154
        %2551 = vmatpush.msra.mxu0 %v1153
        %2552 = vmatpush.msra.mxu0 %v1152
        %2553 = vmatpush.msra.mxu0 %v1151
        %2554 = vmatpush.msra.mxu0 %v1150
        %2555 = vmatpush.msra.mxu0 %v1149
        %2556 = vmatpush.msra.mxu0 %v1148
        %2557 = vmatpush.msra.mxu0 %v1147
        %2558 = vmatpush.msra.mxu0 %v1146
        %2559 = vmatpush.msra.mxu0 %v1145
        %2560 = vmatpush.msra.mxu0 %v1144
        %2561 = vmatpush.msra.mxu0 %v1143
        %2562 = vmatpush.msra.mxu0 %v1142
        %2563 = vmatpush.msra.mxu0 %v1141
        %2564 = vmatpush.msra.mxu0 %v1140
        %2565 = vmatmul.f32.gmra.mxu0 %v1357
        %v2566 = vpop.f32.mrf.mxu0
        %v2567 = vadd.f32 %v2547, %v2566
        %2568 = vdwg.mxu0
        %2569 = vmatpush.msra.mxu0 %v1171
        %2570 = vmatpush.msra.mxu0 %v1170
        %2571 = vmatpush.msra.mxu0 %v1169
        %2572 = vmatpush.msra.mxu0 %v1168
        %2573 = vmatpush.msra.mxu0 %v1167
        %2574 = vmatpush.msra.mxu0 %v1166
        %2575 = vmatpush.msra.mxu0 %v1165
        %2576 = vmatpush.msra.mxu0 %v1164
        %2577 = vmatpush.msra.mxu0 %v1163
        %2578 = vmatpush.msra.mxu0 %v1162
        %2579 = vmatpush.msra.mxu0 %v1161
        %2580 = vmatpush.msra.mxu0 %v1160
        %2581 = vmatpush.msra.mxu0 %v1159
        %2582 = vmatpush.msra.mxu0 %v1158
        %2583 = vmatpush.msra.mxu0 %v1157
        %2584 = vmatpush.msra.mxu0 %v1156
        %2585 = vmatmul.f32.gmra.mxu0 %v1358
        %v2586 = vpop.f32.mrf.mxu0
        %v2587 = vadd.f32 %v2567, %v2586
        %2588 = vdwg.mxu0
        %2589 = vmatpush.msra.mxu0 %v1187
        %2590 = vmatpush.msra.mxu0 %v1186
        %2591 = vmatpush.msra.mxu0 %v1185
        %2592 = vmatpush.msra.mxu0 %v1184
        %2593 = vmatpush.msra.mxu0 %v1183
        %2594 = vmatpush.msra.mxu0 %v1182
        %2595 = vmatpush.msra.mxu0 %v1181
        %2596 = vmatpush.msra.mxu0 %v1180
        %2597 = vmatpush.msra.mxu0 %v1179
        %2598 = vmatpush.msra.mxu0 %v1178
        %2599 = vmatpush.msra.mxu0 %v1177
        %2600 = vmatpush.msra.mxu0 %v1176
        %2601 = vmatpush.msra.mxu0 %v1175
        %2602 = vmatpush.msra.mxu0 %v1174
        %2603 = vmatpush.msra.mxu0 %v1173
        %2604 = vmatpush.msra.mxu0 %v1172
        %2605 = vmatmul.f32.gmra.mxu0 %v1359
        %v2606 = vpop.f32.mrf.mxu0
        %v2607 = vadd.f32 %v2587, %v2606
        %2608 = vdwg.mxu0
        %2609 = vmatpush.msra.mxu0 %v1203
        %2610 = vmatpush.msra.mxu0 %v1202
        %2611 = vmatpush.msra.mxu0 %v1201
        %2612 = vmatpush.msra.mxu0 %v1200
        %2613 = vmatpush.msra.mxu0 %v1199
        %2614 = vmatpush.msra.mxu0 %v1198
        %2615 = vmatpush.msra.mxu0 %v1197
        %2616 = vmatpush.msra.mxu0 %v1196
        %2617 = vmatpush.msra.mxu0 %v1195
        %2618 = vmatpush.msra.mxu0 %v1194
        %2619 = vmatpush.msra.mxu0 %v1193
        %2620 = vmatpush.msra.mxu0 %v1192
        %2621 = vmatpush.msra.mxu0 %v1191
        %2622 = vmatpush.msra.mxu0 %v1190
        %2623 = vmatpush.msra.mxu0 %v1189
        %2624 = vmatpush.msra.mxu0 %v1188
        %2625 = vmatmul.f32.gmra.mxu0 %v1360
        %v2626 = vpop.f32.mrf.mxu0
        %v2627 = vadd.f32 %v2607, %v2626
        %2628 = vdwg.mxu0
        %2629 = vmatpush.msra.mxu0 %v1219
        %2630 = vmatpush.msra.mxu0 %v1218
        %2631 = vmatpush.msra.mxu0 %v1217
        %2632 = vmatpush.msra.mxu0 %v1216
        %2633 = vmatpush.msra.mxu0 %v1215
        %2634 = vmatpush.msra.mxu0 %v1214
        %2635 = vmatpush.msra.mxu0 %v1213
        %2636 = vmatpush.msra.mxu0 %v1212
        %2637 = vmatpush.msra.mxu0 %v1211
        %2638 = vmatpush.msra.mxu0 %v1210
        %2639 = vmatpush.msra.mxu0 %v1209
        %2640 = vmatpush.msra.mxu0 %v1208
        %2641 = vmatpush.msra.mxu0 %v1207
        %2642 = vmatpush.msra.mxu0 %v1206
        %2643 = vmatpush.msra.mxu0 %v1205
        %2644 = vmatpush.msra.mxu0 %v1204
        %2645 = vmatmul.f32.gmra.mxu0 %v1361
        %v2646 = vpop.f32.mrf.mxu0
        %v2647 = vadd.f32 %v2627, %v2646
        %2648 = vdwg.mxu0
        %2649 = vmatpush.msra.mxu0 %v1235
        %2650 = vmatpush.msra.mxu0 %v1234
        %2651 = vmatpush.msra.mxu0 %v1233
        %2652 = vmatpush.msra.mxu0 %v1232
        %2653 = vmatpush.msra.mxu0 %v1231
        %2654 = vmatpush.msra.mxu0 %v1230
        %2655 = vmatpush.msra.mxu0 %v1229
        %2656 = vmatpush.msra.mxu0 %v1228
        %2657 = vmatpush.msra.mxu0 %v1227
        %2658 = vmatpush.msra.mxu0 %v1226
        %2659 = vmatpush.msra.mxu0 %v1225
        %2660 = vmatpush.msra.mxu0 %v1224
        %2661 = vmatpush.msra.mxu0 %v1223
        %2662 = vmatpush.msra.mxu0 %v1222
        %2663 = vmatpush.msra.mxu0 %v1221
        %2664 = vmatpush.msra.mxu0 %v1220
        %2665 = vmatmul.f32.gmra.mxu0 %v1362
        %v2666 = vpop.f32.mrf.mxu0
        %v2667 = vadd.f32 %v2647, %v2666
        %2668 = vdwg.mxu0
        %2669 = vmatpush.msra.mxu0 %v1251
        %2670 = vmatpush.msra.mxu0 %v1250
        %2671 = vmatpush.msra.mxu0 %v1249
        %2672 = vmatpush.msra.mxu0 %v1248
        %2673 = vmatpush.msra.mxu0 %v1247
        %2674 = vmatpush.msra.mxu0 %v1246
        %2675 = vmatpush.msra.mxu0 %v1245
        %2676 = vmatpush.msra.mxu0 %v1244
        %2677 = vmatpush.msra.mxu0 %v1243
        %2678 = vmatpush.msra.mxu0 %v1242
        %2679 = vmatpush.msra.mxu0 %v1241
        %2680 = vmatpush.msra.mxu0 %v1240
        %2681 = vmatpush.msra.mxu0 %v1239
        %2682 = vmatpush.msra.mxu0 %v1238
        %2683 = vmatpush.msra.mxu0 %v1237
        %2684 = vmatpush.msra.mxu0 %v1236
        %2685 = vmatmul.f32.gmra.mxu0 %v1363
        %v2686 = vpop.f32.mrf.mxu0
        %v2687 = vadd.f32 %v2667, %v2686
        %2688 = vdwg.mxu0
        %2689 = vmatpush.msra.mxu0 %v1267
        %2690 = vmatpush.msra.mxu0 %v1266
        %2691 = vmatpush.msra.mxu0 %v1265
        %2692 = vmatpush.msra.mxu0 %v1264
        %2693 = vmatpush.msra.mxu0 %v1263
        %2694 = vmatpush.msra.mxu0 %v1262
        %2695 = vmatpush.msra.mxu0 %v1261
        %2696 = vmatpush.msra.mxu0 %v1260
        %2697 = vmatpush.msra.mxu0 %v1259
        %2698 = vmatpush.msra.mxu0 %v1258
        %2699 = vmatpush.msra.mxu0 %v1257
        %2700 = vmatpush.msra.mxu0 %v1256
        %2701 = vmatpush.msra.mxu0 %v1255
        %2702 = vmatpush.msra.mxu0 %v1254
        %2703 = vmatpush.msra.mxu0 %v1253
        %2704 = vmatpush.msra.mxu0 %v1252
        %2705 = vmatmul.f32.gmra.mxu0 %v1364
        %v2706 = vpop.f32.mrf.mxu0
        %v2707 = vadd.f32 %v2687, %v2706
        %2708 = vdwg.mxu0
        %v2709 = vadd.f32 %v227, %v2707
        %vm2710 = vcmask 517120
        %2711 = vst.msk [vmem:[%s220] sm:$0x3] %vm2710, %v2709
        %p2712 = scmp.lt.s32.totalorder %s20, 1
        %s2713 = scalar_select %p2712, %s20, 1
        %s2714 = smul.addr %s2713, 2
        %s2715 = scalar_lea.vmem %s2, %s2714
        // Predicated region
        $region37: #{mlp_forward.1} parent=27 // pred_check
          %p2716 = pneg %p106
        $region38: #{mlp_forward.1} parent=27 // pred_check_branch
          %2718 = sbr.rel (%p2716) target = $region40
        $region39: #{mlp_forward.1} parent=27 // pred_region
          _
        $region40: #{mlp_forward.1} parent=27 // pred_fallthru
          _
      $region28: #{mlp_forward.1} parent=5 // pred_fallthru
        _
      %p2719 = scmp.le.s32.totalorder 2, %s11
      // Predicated region
      $region41: #{mlp_forward.1} parent=5 // pred_check
        %p2720 = pneg %p2719
      $region42: #{mlp_forward.1} parent=5 // pred_check_branch
        %2722 = sbr.rel (%p2720) target = $region44
      $region43: #{mlp_forward.1} parent=5 // pred_region
        %s2723 = ssub.s32 %s11, 2
        // Predicated region
        $region45: #{mlp_forward.1} parent=43 // pred_check
          %p2724 = pneg %p112
        $region46: #{mlp_forward.1} parent=43 // pred_check_branch
          %2726 = sbr.rel (%p2724) target = $region48
        $region47: #{mlp_forward.1} parent=43 // pred_region
          %p2727 = scmp.lt.s32.totalorder %s22, 1
          %s2728 = scalar_select %p2727, %s22, 1
          %s2729 = smul.addr %s2728, 2
          %s2730 = scalar_lea.vmem %s2, %s2729
        $region48: #{mlp_forward.1} parent=43 // pred_fallthru
          _
      $region44: #{mlp_forward.1} parent=5 // pred_fallthru
        _
    $region6: #{mlp_forward.1} parent=1 // loop_footer
      %s15 = sadd.s32 1, %s11
    $region7: #{mlp_forward.1} parent=1 // loop_footer_branch
      %10 = sbr.rel target = $region3
    $region8: #{mlp_forward.1} parent=1 // loop_exit
      _
    %2731 = vsyncpa [#allocation3], 1
    %s2732 = scalar_lea.sflag [#allocation3], 1
    %2733 = vsyncpa %s2732, 1

</llo_original>
